<compile_context>
chip_gen: v7x
topology: tpu7x:2x2x1
jax: 0.10.0
libtpu: 0.0.40
codegen_flags: <defaults>
</compile_context>

<pallas_src>
import math

import jax
import jax.numpy as jnp
from jax.experimental import pallas as pl
from jax.experimental.pallas import tpu as pltpu

# ---------------- model config (small, consistent with module __init__) ----------------
D_MODEL = 32
NHEAD = 4
DIM_FF = 64
SEQ = 8
BATCH = 2
HEAD_DIM = D_MODEL // NHEAD
LN_EPS = 1e-5
PACK_W = 3 * D_MODEL          # packed operand width (96)


def _layernorm(x, gamma, beta):
    # PyTorch LayerNorm: biased variance, eps inside sqrt
    mean = jnp.mean(x, axis=-1, keepdims=True)
    var = jnp.mean((x - mean) ** 2, axis=-1, keepdims=True)
    inv = jax.lax.rsqrt(var + LN_EPS)
    return (x - mean) * inv * gamma + beta


def encoder_layer_kernel(x_ref, w_ref, vec_ref, o_ref):
    S, B, E, H, HD, F = SEQ, BATCH, D_MODEL, NHEAD, HEAD_DIM, DIM_FF

    # x_ref is the free (S, B*E) view of the (S, B, E) input: batch b lives in lane
    # columns [b*E, (b+1)*E). Gather into one batch-contiguous (B*S, E) row block.
    x = jnp.concatenate([x_ref[:, b * E:(b + 1) * E] for b in range(B)], axis=0)

    # ---- unpack weights (single DMA'd operand; Q columns of ipw pre-scaled) ----
    ipw = w_ref[0:E, :]                        # (E, 3E)
    opw = w_ref[E:2 * E, 0:E]                  # (E, E)
    l1w = w_ref[2 * E:3 * E, 0:F]              # (E, F)
    l2w = w_ref[3 * E:3 * E + F, 0:E]          # (F, E)

    # ---- unpack the 8 small row vectors (single DMA'd operand) ----
    ipb = vec_ref[0:1, 0:3 * E]
    opb = vec_ref[1:2, 0:E]
    l1b = vec_ref[2:3, 0:F]
    l2b = vec_ref[3:4, 0:E]
    g1 = vec_ref[4:5, 0:E]
    b1 = vec_ref[5:6, 0:E]
    g2 = vec_ref[6:7, 0:E]
    b2 = vec_ref[7:8, 0:E]

    # ---- QKV projection for all B*S rows at once (scale already folded in) ----
    qkv = jnp.dot(x, ipw, preferred_element_type=jnp.float32) + ipb     # (B*S, 3E)
    q = qkv[:, 0:E]
    k = qkv[:, E:2 * E]
    v = qkv[:, 2 * E:3 * E]

    # ---- attention: one batched contraction over all (batch, head) tiles ----
    def to_tiles(t):                        # (B*S, E) -> (B*H, S, HD)
        return jnp.stack([t[b * S:(b + 1) * S, h * HD:(h + 1) * HD]
                          for b in range(B) for h in range(H)], axis=0)

    q_t, k_t, v_t = to_tiles(q), to_tiles(k), to_tiles(v)
    s = jnp.einsum("nqd,nkd->nqk", q_t, k_t,
                   preferred_element_type=jnp.float32)                  # (B*H, S, S)
    s = s - jnp.max(s, axis=-1, keepdims=True)
    p = jnp.exp(s)
    p = p * pl.reciprocal(jnp.sum(p, axis=-1, keepdims=True), approx=True)
    o_t = jnp.einsum("nqk,nkd->nqd", p, v_t,
                     preferred_element_type=jnp.float32)                # (B*H, S, HD)

    # ---- output projection: fold the head concat into per-head matmul accumulation ----
    parts = []
    for b in range(B):
        acc = jnp.zeros((S, E), jnp.float32)
        for h in range(H):
            acc = acc + jnp.dot(o_t[b * H + h], opw[h * HD:(h + 1) * HD, :],
                                preferred_element_type=jnp.float32)
        parts.append(acc)
    attn = jnp.concatenate(parts, axis=0) + opb                         # (B*S, E)

    # ---- residual + norm1 ----
    y = _layernorm(x + attn, g1, b1)

    # ---- feed-forward: linear1 -> relu -> linear2 ----
    h1 = jnp.maximum(jnp.dot(y, l1w, preferred_element_type=jnp.float32) + l1b, 0.0)
    h2 = jnp.dot(h1, l2w, preferred_element_type=jnp.float32) + l2b

    # ---- residual + norm2 ----
    z = _layernorm(y + h2, g2, b2)                                      # (B*S, E)

    # ---- scatter rows back to the (S, B*E) output layout ----
    for b in range(B):
        o_ref[:, b * E:(b + 1) * E] = z[b * S:(b + 1) * S, :].astype(o_ref.dtype)


def transformer_encoder_layer(src, packed):
    """src: (S, B, E) float32 (PyTorch MultiheadAttention layout). Returns (S, B, E)."""
    S, B, E = src.shape
    # Contiguous row-major reshape (S,B,E)->(S,B*E) is a free bitcast — NOT a transpose —
    # so there is no extra HBM round trip on either side of the kernel.
    x2d = src.reshape(S, B * E)
    w, vecs = packed["w"], packed["vecs"]
    out2d = pl.pallas_call(
        encoder_layer_kernel,
        out_shape=jax.ShapeDtypeStruct((S, B * E), jnp.float32),
        grid_spec=pltpu.PrefetchScalarGridSpec(
            num_scalar_prefetch=0,
            grid=(1,),  # collapsed grid: the whole layer is far below one grid-step's overhead
            in_specs=[
                pl.BlockSpec((S, B * E), lambda i: (0, 0)),
                pl.BlockSpec(w.shape, lambda i: (0, 0)),
                pl.BlockSpec(vecs.shape, lambda i: (0, 0)),
            ],
            out_specs=pl.BlockSpec((S, B * E), lambda i: (0, 0)),
        ),
        compiler_params=pltpu.CompilerParams(dimension_semantics=("arbitrary",)),
    )(x2d, w, vecs)
    return out2d.reshape(S, B, E)


# ---------------- parameter packing (runs once, at parameter-init time) ----------------
def pack_params(p):
    """Fold 1/sqrt(head_dim) into the Q part of the in-projection and pack every weight into
    one (160,96) slab plus one (8,96) vector slab -> 3 kernel input DMAs instead of 13."""
    E, F, W3 = D_MODEL, DIM_FF, PACK_W
    scale = 1.0 / math.sqrt(HEAD_DIM)
    qscale = jnp.concatenate([jnp.full((E,), scale, jnp.float32),
                              jnp.ones((2 * E,), jnp.float32)])
    ipw = p["ipw"] * qscale[None, :]
    ipb = p["ipb"] * qscale[None, :]

    def pad(a):
        return jnp.pad(a, ((0, 0), (0, W3 - a.shape[1])))

    w = jnp.concatenate([pad(ipw), pad(p["opw"]), pad(p["l1w"]), pad(p["l2w"])], axis=0)
    vecs = jnp.concatenate([pad(ipb), pad(p["opb"]), pad(p["l1b"]), pad(p["l2b"]),
                            pad(p["g1"]), pad(p["b1"]), pad(p["g2"]), pad(p["b2"])], axis=0)
    return {"w": w, "vecs": vecs}


# ---------------- pure-JAX reference (for correctness check, uses raw params) ----------------
def reference(src, params):
    x = jnp.transpose(src, (1, 0, 2))           # (B, S, E)
    qkv = x @ params["ipw"] + params["ipb"]
    q, k, v = jnp.split(qkv, 3, axis=-1)

    def split_heads(t):
        return t.reshape(BATCH, SEQ, NHEAD, HEAD_DIM).transpose(0, 2, 1, 3)

    qh, kh, vh = split_heads(q), split_heads(k), split_heads(v)
    s = jnp.einsum("bhqd,bhkd->bhqk", qh * (1.0 / math.sqrt(HEAD_DIM)), kh)
    p = jax.nn.softmax(s, axis=-1)
    a = jnp.einsum("bhqk,bhkd->bhqd", p, vh)
    a = a.transpose(0, 2, 1, 3).reshape(BATCH, SEQ, D_MODEL)
    a = a @ params["opw"] + params["opb"]

    def ln(t, g, b):
        m = jnp.mean(t, -1, keepdims=True)
        var = jnp.mean((t - m) ** 2, -1, keepdims=True)
        return (t - m) / jnp.sqrt(var + LN_EPS) * g + b

    y = ln(x + a, params["g1"], params["b1"])
    h = jnp.maximum(y @ params["l1w"] + params["l1b"], 0.0)
    h = h @ params["l2w"] + params["l2b"]
    z = ln(y + h, params["g2"], params["b2"])
    return jnp.transpose(z, (1, 0, 2))


def init_params(key):
    ks = jax.random.split(key, 8)
    scale = 0.1
    # PyTorch Linear stores W as (out, in) and computes x @ W.T; here we store the
    # already-transposed (in, out) matrices so the kernel does x @ W + b.
    return {
        "ipw": scale * jax.random.normal(ks[0], (D_MODEL, 3 * D_MODEL), jnp.float32),
        "ipb": scale * jax.random.normal(ks[1], (1, 3 * D_MODEL), jnp.float32),
        "opw": scale * jax.random.normal(ks[2], (D_MODEL, D_MODEL), jnp.float32),
        "opb": scale * jax.random.normal(ks[3], (1, D_MODEL), jnp.float32),
        "l1w": scale * jax.random.normal(ks[4], (D_MODEL, DIM_FF), jnp.float32),
        "l1b": scale * jax.random.normal(ks[5], (1, DIM_FF), jnp.float32),
        "l2w": scale * jax.random.normal(ks[6], (DIM_FF, D_MODEL), jnp.float32),
        "l2b": scale * jax.random.normal(ks[7], (1, D_MODEL), jnp.float32),
        "g1": jnp.ones((1, D_MODEL), jnp.float32),
        "b1": jnp.zeros((1, D_MODEL), jnp.float32),
        "g2": jnp.ones((1, D_MODEL), jnp.float32),
        "b2": jnp.zeros((1, D_MODEL), jnp.float32),
    }


if __name__ == "__main__":
    key = jax.random.PRNGKey(0)
    k_x, k_p = jax.random.split(key)
    src = jax.random.normal(k_x, (SEQ, BATCH, D_MODEL), jnp.float32)
    raw = init_params(k_p)
    packed = jax.block_until_ready(pack_params(raw))   # one-time parameter packing

    layer = jax.jit(transformer_encoder_layer)
    out = jax.block_until_ready(layer(src, packed))

    ref = reference(src, raw)
    assert out.shape == (SEQ, BATCH, D_MODEL)
    err = float(jnp.max(jnp.abs(out - ref)))
    # Tolerance leaves headroom for the EUP approximate reciprocal in the softmax;
    # a real bug (wrong weights / ordering) produces O(0.1-1) errors.
    assert err < 1e-2, err
    print("KERNEL_OK")
</pallas_src>

<mosaic_0001>
module attributes {stable_mosaic.version = 11 : i64} {
  func.func @encoder_layer_kernel(%arg0: i32, %arg1: memref<8x64xf32, #tpu.memory_space<vmem>>, %arg2: memref<160x96xf32, #tpu.memory_space<vmem>>, %arg3: memref<8x96xf32, #tpu.memory_space<vmem>>, %arg4: memref<8x64xf32, #tpu.memory_space<vmem>>) attributes {dimension_semantics = [#tpu.dimension_semantics<arbitrary>], iteration_bounds = array<i64: 1>, scalar_prefetch = 0 : i64, scratch_operands = 0 : i64, tpu.core_type = #tpu.core_type<tc>, window_params = [{pipeline_mode = #tpu.pipeline_mode<synchronous>, transform_indices = @transform_0, window_bounds = array<i64: 8, 64>}, {pipeline_mode = #tpu.pipeline_mode<synchronous>, transform_indices = @transform_1, window_bounds = array<i64: 160, 96>}, {pipeline_mode = #tpu.pipeline_mode<synchronous>, transform_indices = @transform_2, window_bounds = array<i64: 8, 96>}, {pipeline_mode = #tpu.pipeline_mode<synchronous>, transform_indices = @transform_3, window_bounds = array<i64: 8, 64>}]} {
    %c0 = arith.constant 0 : index
    %c0_0 = arith.constant 0 : index
    %0 = vector.load %arg1[%c0, %c0_0] : memref<8x64xf32, #tpu.memory_space<vmem>>, vector<8x32xf32>
    %c0_1 = arith.constant 0 : index
    %c32 = arith.constant 32 : index
    %1 = vector.load %arg1[%c0_1, %c32] : memref<8x64xf32, #tpu.memory_space<vmem>>, vector<8x32xf32>
    %2 = tpu.concatenate %0, %1 in 0 : vector<8x32xf32>, vector<8x32xf32> -> vector<16x32xf32>
    %c0_2 = arith.constant 0 : index
    %c0_3 = arith.constant 0 : index
    %3 = vector.load %arg2[%c0_2, %c0_3] : memref<160x96xf32, #tpu.memory_space<vmem>>, vector<32x96xf32>
    %c32_4 = arith.constant 32 : index
    %c0_5 = arith.constant 0 : index
    %4 = vector.load %arg2[%c32_4, %c0_5] : memref<160x96xf32, #tpu.memory_space<vmem>>, vector<32x32xf32>
    %c64 = arith.constant 64 : index
    %c0_6 = arith.constant 0 : index
    %5 = vector.load %arg2[%c64, %c0_6] : memref<160x96xf32, #tpu.memory_space<vmem>>, vector<32x64xf32>
    %c96 = arith.constant 96 : index
    %c0_7 = arith.constant 0 : index
    %6 = vector.load %arg2[%c96, %c0_7] : memref<160x96xf32, #tpu.memory_space<vmem>>, vector<64x32xf32>
    %c0_8 = arith.constant 0 : index
    %c0_9 = arith.constant 0 : index
    %7 = vector.load %arg3[%c0_8, %c0_9] : memref<8x96xf32, #tpu.memory_space<vmem>>, vector<1x96xf32>
    %c1 = arith.constant 1 : index
    %c0_10 = arith.constant 0 : index
    %8 = vector.load %arg3[%c1, %c0_10] : memref<8x96xf32, #tpu.memory_space<vmem>>, vector<1x32xf32>
    %c2 = arith.constant 2 : index
    %c0_11 = arith.constant 0 : index
    %9 = vector.load %arg3[%c2, %c0_11] : memref<8x96xf32, #tpu.memory_space<vmem>>, vector<1x64xf32>
    %c3 = arith.constant 3 : index
    %c0_12 = arith.constant 0 : index
    %10 = vector.load %arg3[%c3, %c0_12] : memref<8x96xf32, #tpu.memory_space<vmem>>, vector<1x32xf32>
    %c4 = arith.constant 4 : index
    %c0_13 = arith.constant 0 : index
    %11 = vector.load %arg3[%c4, %c0_13] : memref<8x96xf32, #tpu.memory_space<vmem>>, vector<1x32xf32>
    %c5 = arith.constant 5 : index
    %c0_14 = arith.constant 0 : index
    %12 = vector.load %arg3[%c5, %c0_14] : memref<8x96xf32, #tpu.memory_space<vmem>>, vector<1x32xf32>
    %c6 = arith.constant 6 : index
    %c0_15 = arith.constant 0 : index
    %13 = vector.load %arg3[%c6, %c0_15] : memref<8x96xf32, #tpu.memory_space<vmem>>, vector<1x32xf32>
    %c7 = arith.constant 7 : index
    %c0_16 = arith.constant 0 : index
    %14 = vector.load %arg3[%c7, %c0_16] : memref<8x96xf32, #tpu.memory_space<vmem>>, vector<1x32xf32>
    %cst = arith.constant dense<0.000000e+00> : vector<16x96xf32>
    %15 = tpu.matmul %2, %3, %cst {dimension_numbers = #tpu.dot_dimension_numbers<[1], [0], [0], [1], [0, 0, 1, 1], [], []>} : vector<16x32xf32>, vector<32x96xf32>, vector<16x96xf32> -> vector<16x96xf32>
    %16 = vector.broadcast %7 : vector<1x96xf32> to vector<16x96xf32>
    %17 = arith.addf %15, %16 : vector<16x96xf32>
    %18 = vector.extract_strided_slice %17 {offsets = [0, 0], sizes = [16, 32], strides = [1, 1]} : vector<16x96xf32> to vector<16x32xf32>
    %19 = vector.extract_strided_slice %17 {offsets = [0, 32], sizes = [16, 32], strides = [1, 1]} : vector<16x96xf32> to vector<16x32xf32>
    %20 = vector.extract_strided_slice %17 {offsets = [0, 64], sizes = [16, 32], strides = [1, 1]} : vector<16x96xf32> to vector<16x32xf32>
    %21 = vector.extract_strided_slice %18 {offsets = [0, 0], sizes = [8, 8], strides = [1, 1]} : vector<16x32xf32> to vector<8x8xf32>
    %22 = vector.extract_strided_slice %18 {offsets = [0, 8], sizes = [8, 8], strides = [1, 1]} : vector<16x32xf32> to vector<8x8xf32>
    %23 = vector.extract_strided_slice %18 {offsets = [0, 16], sizes = [8, 8], strides = [1, 1]} : vector<16x32xf32> to vector<8x8xf32>
    %24 = vector.extract_strided_slice %18 {offsets = [0, 24], sizes = [8, 8], strides = [1, 1]} : vector<16x32xf32> to vector<8x8xf32>
    %25 = vector.extract_strided_slice %18 {offsets = [8, 0], sizes = [8, 8], strides = [1, 1]} : vector<16x32xf32> to vector<8x8xf32>
    %26 = vector.extract_strided_slice %18 {offsets = [8, 8], sizes = [8, 8], strides = [1, 1]} : vector<16x32xf32> to vector<8x8xf32>
    %27 = vector.extract_strided_slice %18 {offsets = [8, 16], sizes = [8, 8], strides = [1, 1]} : vector<16x32xf32> to vector<8x8xf32>
    %28 = vector.extract_strided_slice %18 {offsets = [8, 24], sizes = [8, 8], strides = [1, 1]} : vector<16x32xf32> to vector<8x8xf32>
    %29 = vector.shape_cast %21 : vector<8x8xf32> to vector<1x8x8xf32>
    %30 = vector.shape_cast %22 : vector<8x8xf32> to vector<1x8x8xf32>
    %31 = vector.shape_cast %23 : vector<8x8xf32> to vector<1x8x8xf32>
    %32 = vector.shape_cast %24 : vector<8x8xf32> to vector<1x8x8xf32>
    %33 = vector.shape_cast %25 : vector<8x8xf32> to vector<1x8x8xf32>
    %34 = vector.shape_cast %26 : vector<8x8xf32> to vector<1x8x8xf32>
    %35 = vector.shape_cast %27 : vector<8x8xf32> to vector<1x8x8xf32>
    %36 = vector.shape_cast %28 : vector<8x8xf32> to vector<1x8x8xf32>
    %37 = tpu.concatenate %29, %30, %31, %32, %33, %34, %35, %36 in 0 : vector<1x8x8xf32>, vector<1x8x8xf32>, vector<1x8x8xf32>, vector<1x8x8xf32>, vector<1x8x8xf32>, vector<1x8x8xf32>, vector<1x8x8xf32>, vector<1x8x8xf32> -> vector<8x8x8xf32>
    %38 = vector.extract_strided_slice %19 {offsets = [0, 0], sizes = [8, 8], strides = [1, 1]} : vector<16x32xf32> to vector<8x8xf32>
    %39 = vector.extract_strided_slice %19 {offsets = [0, 8], sizes = [8, 8], strides = [1, 1]} : vector<16x32xf32> to vector<8x8xf32>
    %40 = vector.extract_strided_slice %19 {offsets = [0, 16], sizes = [8, 8], strides = [1, 1]} : vector<16x32xf32> to vector<8x8xf32>
    %41 = vector.extract_strided_slice %19 {offsets = [0, 24], sizes = [8, 8], strides = [1, 1]} : vector<16x32xf32> to vector<8x8xf32>
    %42 = vector.extract_strided_slice %19 {offsets = [8, 0], sizes = [8, 8], strides = [1, 1]} : vector<16x32xf32> to vector<8x8xf32>
    %43 = vector.extract_strided_slice %19 {offsets = [8, 8], sizes = [8, 8], strides = [1, 1]} : vector<16x32xf32> to vector<8x8xf32>
    %44 = vector.extract_strided_slice %19 {offsets = [8, 16], sizes = [8, 8], strides = [1, 1]} : vector<16x32xf32> to vector<8x8xf32>
    %45 = vector.extract_strided_slice %19 {offsets = [8, 24], sizes = [8, 8], strides = [1, 1]} : vector<16x32xf32> to vector<8x8xf32>
    %46 = vector.shape_cast %38 : vector<8x8xf32> to vector<1x8x8xf32>
    %47 = vector.shape_cast %39 : vector<8x8xf32> to vector<1x8x8xf32>
    %48 = vector.shape_cast %40 : vector<8x8xf32> to vector<1x8x8xf32>
    %49 = vector.shape_cast %41 : vector<8x8xf32> to vector<1x8x8xf32>
    %50 = vector.shape_cast %42 : vector<8x8xf32> to vector<1x8x8xf32>
    %51 = vector.shape_cast %43 : vector<8x8xf32> to vector<1x8x8xf32>
    %52 = vector.shape_cast %44 : vector<8x8xf32> to vector<1x8x8xf32>
    %53 = vector.shape_cast %45 : vector<8x8xf32> to vector<1x8x8xf32>
    %54 = tpu.concatenate %46, %47, %48, %49, %50, %51, %52, %53 in 0 : vector<1x8x8xf32>, vector<1x8x8xf32>, vector<1x8x8xf32>, vector<1x8x8xf32>, vector<1x8x8xf32>, vector<1x8x8xf32>, vector<1x8x8xf32>, vector<1x8x8xf32> -> vector<8x8x8xf32>
    %55 = vector.extract_strided_slice %20 {offsets = [0, 0], sizes = [8, 8], strides = [1, 1]} : vector<16x32xf32> to vector<8x8xf32>
    %56 = vector.extract_strided_slice %20 {offsets = [0, 8], sizes = [8, 8], strides = [1, 1]} : vector<16x32xf32> to vector<8x8xf32>
    %57 = vector.extract_strided_slice %20 {offsets = [0, 16], sizes = [8, 8], strides = [1, 1]} : vector<16x32xf32> to vector<8x8xf32>
    %58 = vector.extract_strided_slice %20 {offsets = [0, 24], sizes = [8, 8], strides = [1, 1]} : vector<16x32xf32> to vector<8x8xf32>
    %59 = vector.extract_strided_slice %20 {offsets = [8, 0], sizes = [8, 8], strides = [1, 1]} : vector<16x32xf32> to vector<8x8xf32>
    %60 = vector.extract_strided_slice %20 {offsets = [8, 8], sizes = [8, 8], strides = [1, 1]} : vector<16x32xf32> to vector<8x8xf32>
    %61 = vector.extract_strided_slice %20 {offsets = [8, 16], sizes = [8, 8], strides = [1, 1]} : vector<16x32xf32> to vector<8x8xf32>
    %62 = vector.extract_strided_slice %20 {offsets = [8, 24], sizes = [8, 8], strides = [1, 1]} : vector<16x32xf32> to vector<8x8xf32>
    %63 = vector.shape_cast %55 : vector<8x8xf32> to vector<1x8x8xf32>
    %64 = vector.shape_cast %56 : vector<8x8xf32> to vector<1x8x8xf32>
    %65 = vector.shape_cast %57 : vector<8x8xf32> to vector<1x8x8xf32>
    %66 = vector.shape_cast %58 : vector<8x8xf32> to vector<1x8x8xf32>
    %67 = vector.shape_cast %59 : vector<8x8xf32> to vector<1x8x8xf32>
    %68 = vector.shape_cast %60 : vector<8x8xf32> to vector<1x8x8xf32>
    %69 = vector.shape_cast %61 : vector<8x8xf32> to vector<1x8x8xf32>
    %70 = vector.shape_cast %62 : vector<8x8xf32> to vector<1x8x8xf32>
    %71 = tpu.concatenate %63, %64, %65, %66, %67, %68, %69, %70 in 0 : vector<1x8x8xf32>, vector<1x8x8xf32>, vector<1x8x8xf32>, vector<1x8x8xf32>, vector<1x8x8xf32>, vector<1x8x8xf32>, vector<1x8x8xf32>, vector<1x8x8xf32> -> vector<8x8x8xf32>
    "tpu.trace_start"() <{level = 10 : i32, message = "nqd,nkd->nqk"}> : () -> ()
    %cst_17 = arith.constant dense<0.000000e+00> : vector<8x8x8xf32>
    %72 = tpu.matmul %37, %54, %cst_17 {dimension_numbers = #tpu.dot_dimension_numbers<[2], [2], [1], [1], [0, 0, 0, 1, 1, 1], [0], [0]>} : vector<8x8x8xf32>, vector<8x8x8xf32>, vector<8x8x8xf32> -> vector<8x8x8xf32>
    "tpu.trace_stop"() : () -> ()
    %cst_18 = arith.constant dense<0xFF800000> : vector<8x8xf32>
    %73 = vector.multi_reduction <maximumf>, %72, %cst_18 [2] : vector<8x8x8xf32> to vector<8x8xf32>
    %74 = vector.shape_cast %73 : vector<8x8xf32> to vector<8x8x1xf32>
    %75 = vector.broadcast %74 : vector<8x8x1xf32> to vector<8x8x8xf32>
    %76 = arith.subf %72, %75 : vector<8x8x8xf32>
    %77 = math.exp %76 : vector<8x8x8xf32>
    %cst_19 = arith.constant dense<0.000000e+00> : vector<8x8xf32>
    %78 = vector.multi_reduction <add>, %77, %cst_19 [2] : vector<8x8x8xf32> to vector<8x8xf32>
    %79 = vector.shape_cast %78 : vector<8x8xf32> to vector<8x8x1xf32>
    %80 = tpu.reciprocal %79 {approx = true} : vector<8x8x1xf32> -> vector<8x8x1xf32>
    %81 = vector.broadcast %80 : vector<8x8x1xf32> to vector<8x8x8xf32>
    %82 = arith.mulf %77, %81 : vector<8x8x8xf32>
    "tpu.trace_start"() <{level = 10 : i32, message = "nqk,nkd->nqd"}> : () -> ()
    %cst_20 = arith.constant dense<0.000000e+00> : vector<8x8x8xf32>
    %83 = tpu.matmul %82, %71, %cst_20 {dimension_numbers = #tpu.dot_dimension_numbers<[2], [1], [1], [2], [0, 0, 0, 1, 1, 2], [0], [0]>} : vector<8x8x8xf32>, vector<8x8x8xf32>, vector<8x8x8xf32> -> vector<8x8x8xf32>
    %cst_21 = arith.constant 0.000000e+00 : f32
    "tpu.trace_stop"() : () -> ()
    %84 = vector.broadcast %cst_21 : f32 to vector<8x32xf32>
    %85 = vector.extract_strided_slice %83 {offsets = [0, 0, 0], sizes = [1, 8, 8], strides = [1, 1, 1]} : vector<8x8x8xf32> to vector<1x8x8xf32>
    %86 = vector.shape_cast %85 : vector<1x8x8xf32> to vector<8x8xf32>
    %87 = vector.extract_strided_slice %4 {offsets = [0, 0], sizes = [8, 32], strides = [1, 1]} : vector<32x32xf32> to vector<8x32xf32>
    %cst_22 = arith.constant dense<0.000000e+00> : vector<8x32xf32>
    %88 = tpu.matmul %86, %87, %cst_22 {dimension_numbers = #tpu.dot_dimension_numbers<[1], [0], [0], [1], [0, 0, 1, 1], [], []>} : vector<8x8xf32>, vector<8x32xf32>, vector<8x32xf32> -> vector<8x32xf32>
    %89 = arith.addf %84, %88 : vector<8x32xf32>
    %90 = vector.extract_strided_slice %83 {offsets = [1, 0, 0], sizes = [1, 8, 8], strides = [1, 1, 1]} : vector<8x8x8xf32> to vector<1x8x8xf32>
    %91 = vector.shape_cast %90 : vector<1x8x8xf32> to vector<8x8xf32>
    %92 = vector.extract_strided_slice %4 {offsets = [8, 0], sizes = [8, 32], strides = [1, 1]} : vector<32x32xf32> to vector<8x32xf32>
    %cst_23 = arith.constant dense<0.000000e+00> : vector<8x32xf32>
    %93 = tpu.matmul %91, %92, %cst_23 {dimension_numbers = #tpu.dot_dimension_numbers<[1], [0], [0], [1], [0, 0, 1, 1], [], []>} : vector<8x8xf32>, vector<8x32xf32>, vector<8x32xf32> -> vector<8x32xf32>
    %94 = arith.addf %89, %93 : vector<8x32xf32>
    %95 = vector.extract_strided_slice %83 {offsets = [2, 0, 0], sizes = [1, 8, 8], strides = [1, 1, 1]} : vector<8x8x8xf32> to vector<1x8x8xf32>
    %96 = vector.shape_cast %95 : vector<1x8x8xf32> to vector<8x8xf32>
    %97 = vector.extract_strided_slice %4 {offsets = [16, 0], sizes = [8, 32], strides = [1, 1]} : vector<32x32xf32> to vector<8x32xf32>
    %cst_24 = arith.constant dense<0.000000e+00> : vector<8x32xf32>
    %98 = tpu.matmul %96, %97, %cst_24 {dimension_numbers = #tpu.dot_dimension_numbers<[1], [0], [0], [1], [0, 0, 1, 1], [], []>} : vector<8x8xf32>, vector<8x32xf32>, vector<8x32xf32> -> vector<8x32xf32>
    %99 = arith.addf %94, %98 : vector<8x32xf32>
    %100 = vector.extract_strided_slice %83 {offsets = [3, 0, 0], sizes = [1, 8, 8], strides = [1, 1, 1]} : vector<8x8x8xf32> to vector<1x8x8xf32>
    %101 = vector.shape_cast %100 : vector<1x8x8xf32> to vector<8x8xf32>
    %102 = vector.extract_strided_slice %4 {offsets = [24, 0], sizes = [8, 32], strides = [1, 1]} : vector<32x32xf32> to vector<8x32xf32>
    %cst_25 = arith.constant dense<0.000000e+00> : vector<8x32xf32>
    %103 = tpu.matmul %101, %102, %cst_25 {dimension_numbers = #tpu.dot_dimension_numbers<[1], [0], [0], [1], [0, 0, 1, 1], [], []>} : vector<8x8xf32>, vector<8x32xf32>, vector<8x32xf32> -> vector<8x32xf32>
    %104 = arith.addf %99, %103 : vector<8x32xf32>
    %cst_26 = arith.constant 0.000000e+00 : f32
    %105 = vector.broadcast %cst_26 : f32 to vector<8x32xf32>
    %106 = vector.extract_strided_slice %83 {offsets = [4, 0, 0], sizes = [1, 8, 8], strides = [1, 1, 1]} : vector<8x8x8xf32> to vector<1x8x8xf32>
    %107 = vector.shape_cast %106 : vector<1x8x8xf32> to vector<8x8xf32>
    %108 = vector.extract_strided_slice %4 {offsets = [0, 0], sizes = [8, 32], strides = [1, 1]} : vector<32x32xf32> to vector<8x32xf32>
    %cst_27 = arith.constant dense<0.000000e+00> : vector<8x32xf32>
    %109 = tpu.matmul %107, %108, %cst_27 {dimension_numbers = #tpu.dot_dimension_numbers<[1], [0], [0], [1], [0, 0, 1, 1], [], []>} : vector<8x8xf32>, vector<8x32xf32>, vector<8x32xf32> -> vector<8x32xf32>
    %110 = arith.addf %105, %109 : vector<8x32xf32>
    %111 = vector.extract_strided_slice %83 {offsets = [5, 0, 0], sizes = [1, 8, 8], strides = [1, 1, 1]} : vector<8x8x8xf32> to vector<1x8x8xf32>
    %112 = vector.shape_cast %111 : vector<1x8x8xf32> to vector<8x8xf32>
    %113 = vector.extract_strided_slice %4 {offsets = [8, 0], sizes = [8, 32], strides = [1, 1]} : vector<32x32xf32> to vector<8x32xf32>
    %cst_28 = arith.constant dense<0.000000e+00> : vector<8x32xf32>
    %114 = tpu.matmul %112, %113, %cst_28 {dimension_numbers = #tpu.dot_dimension_numbers<[1], [0], [0], [1], [0, 0, 1, 1], [], []>} : vector<8x8xf32>, vector<8x32xf32>, vector<8x32xf32> -> vector<8x32xf32>
    %115 = arith.addf %110, %114 : vector<8x32xf32>
    %116 = vector.extract_strided_slice %83 {offsets = [6, 0, 0], sizes = [1, 8, 8], strides = [1, 1, 1]} : vector<8x8x8xf32> to vector<1x8x8xf32>
    %117 = vector.shape_cast %116 : vector<1x8x8xf32> to vector<8x8xf32>
    %118 = vector.extract_strided_slice %4 {offsets = [16, 0], sizes = [8, 32], strides = [1, 1]} : vector<32x32xf32> to vector<8x32xf32>
    %cst_29 = arith.constant dense<0.000000e+00> : vector<8x32xf32>
    %119 = tpu.matmul %117, %118, %cst_29 {dimension_numbers = #tpu.dot_dimension_numbers<[1], [0], [0], [1], [0, 0, 1, 1], [], []>} : vector<8x8xf32>, vector<8x32xf32>, vector<8x32xf32> -> vector<8x32xf32>
    %120 = arith.addf %115, %119 : vector<8x32xf32>
    %121 = vector.extract_strided_slice %83 {offsets = [7, 0, 0], sizes = [1, 8, 8], strides = [1, 1, 1]} : vector<8x8x8xf32> to vector<1x8x8xf32>
    %122 = vector.shape_cast %121 : vector<1x8x8xf32> to vector<8x8xf32>
    %123 = vector.extract_strided_slice %4 {offsets = [24, 0], sizes = [8, 32], strides = [1, 1]} : vector<32x32xf32> to vector<8x32xf32>
    %cst_30 = arith.constant dense<0.000000e+00> : vector<8x32xf32>
    %124 = tpu.matmul %122, %123, %cst_30 {dimension_numbers = #tpu.dot_dimension_numbers<[1], [0], [0], [1], [0, 0, 1, 1], [], []>} : vector<8x8xf32>, vector<8x32xf32>, vector<8x32xf32> -> vector<8x32xf32>
    %125 = arith.addf %120, %124 : vector<8x32xf32>
    %126 = tpu.concatenate %104, %125 in 0 : vector<8x32xf32>, vector<8x32xf32> -> vector<16x32xf32>
    %127 = vector.broadcast %8 : vector<1x32xf32> to vector<16x32xf32>
    %128 = arith.addf %126, %127 : vector<16x32xf32>
    %129 = arith.addf %2, %128 : vector<16x32xf32>
    %cst_31 = arith.constant dense<0.000000e+00> : vector<16xf32>
    %130 = vector.multi_reduction <add>, %129, %cst_31 [1] : vector<16x32xf32> to vector<16xf32>
    %131 = vector.shape_cast %130 : vector<16xf32> to vector<16x1xf32>
    %cst_32 = arith.constant 3.200000e+01 : f32
    %132 = vector.broadcast %cst_32 : f32 to vector<16x1xf32>
    %133 = arith.divf %131, %132 : vector<16x1xf32>
    %134 = vector.broadcast %133 : vector<16x1xf32> to vector<16x32xf32>
    %135 = arith.subf %129, %134 : vector<16x32xf32>
    %136 = arith.mulf %135, %135 : vector<16x32xf32>
    %cst_33 = arith.constant dense<0.000000e+00> : vector<16xf32>
    %137 = vector.multi_reduction <add>, %136, %cst_33 [1] : vector<16x32xf32> to vector<16xf32>
    %138 = vector.shape_cast %137 : vector<16xf32> to vector<16x1xf32>
    %cst_34 = arith.constant 3.200000e+01 : f32
    %139 = vector.broadcast %cst_34 : f32 to vector<16x1xf32>
    %140 = arith.divf %138, %139 : vector<16x1xf32>
    %cst_35 = arith.constant 9.99999974E-6 : f32
    %141 = vector.broadcast %cst_35 : f32 to vector<16x1xf32>
    %142 = arith.addf %140, %141 : vector<16x1xf32>
    %143 = math.rsqrt %142 : vector<16x1xf32>
    %144 = vector.broadcast %133 : vector<16x1xf32> to vector<16x32xf32>
    %145 = arith.subf %129, %144 : vector<16x32xf32>
    %146 = vector.broadcast %143 : vector<16x1xf32> to vector<16x32xf32>
    %147 = arith.mulf %145, %146 : vector<16x32xf32>
    %148 = vector.broadcast %11 : vector<1x32xf32> to vector<16x32xf32>
    %149 = arith.mulf %147, %148 : vector<16x32xf32>
    %150 = vector.broadcast %12 : vector<1x32xf32> to vector<16x32xf32>
    %151 = arith.addf %149, %150 : vector<16x32xf32>
    %cst_36 = arith.constant dense<0.000000e+00> : vector<16x64xf32>
    %152 = tpu.matmul %151, %5, %cst_36 {dimension_numbers = #tpu.dot_dimension_numbers<[1], [0], [0], [1], [0, 0, 1, 1], [], []>} : vector<16x32xf32>, vector<32x64xf32>, vector<16x64xf32> -> vector<16x64xf32>
    %153 = vector.broadcast %9 : vector<1x64xf32> to vector<16x64xf32>
    %154 = arith.addf %152, %153 : vector<16x64xf32>
    %cst_37 = arith.constant 0.000000e+00 : f32
    %155 = vector.broadcast %cst_37 : f32 to vector<16x64xf32>
    %156 = arith.maximumf %154, %155 : vector<16x64xf32>
    %cst_38 = arith.constant dense<0.000000e+00> : vector<16x32xf32>
    %157 = tpu.matmul %156, %6, %cst_38 {dimension_numbers = #tpu.dot_dimension_numbers<[1], [0], [0], [1], [0, 0, 1, 1], [], []>} : vector<16x64xf32>, vector<64x32xf32>, vector<16x32xf32> -> vector<16x32xf32>
    %158 = vector.broadcast %10 : vector<1x32xf32> to vector<16x32xf32>
    %159 = arith.addf %157, %158 : vector<16x32xf32>
    %160 = arith.addf %151, %159 : vector<16x32xf32>
    %cst_39 = arith.constant dense<0.000000e+00> : vector<16xf32>
    %161 = vector.multi_reduction <add>, %160, %cst_39 [1] : vector<16x32xf32> to vector<16xf32>
    %162 = vector.shape_cast %161 : vector<16xf32> to vector<16x1xf32>
    %cst_40 = arith.constant 3.200000e+01 : f32
    %163 = vector.broadcast %cst_40 : f32 to vector<16x1xf32>
    %164 = arith.divf %162, %163 : vector<16x1xf32>
    %165 = vector.broadcast %164 : vector<16x1xf32> to vector<16x32xf32>
    %166 = arith.subf %160, %165 : vector<16x32xf32>
    %167 = arith.mulf %166, %166 : vector<16x32xf32>
    %cst_41 = arith.constant dense<0.000000e+00> : vector<16xf32>
    %168 = vector.multi_reduction <add>, %167, %cst_41 [1] : vector<16x32xf32> to vector<16xf32>
    %169 = vector.shape_cast %168 : vector<16xf32> to vector<16x1xf32>
    %cst_42 = arith.constant 3.200000e+01 : f32
    %170 = vector.broadcast %cst_42 : f32 to vector<16x1xf32>
    %171 = arith.divf %169, %170 : vector<16x1xf32>
    %cst_43 = arith.constant 9.99999974E-6 : f32
    %172 = vector.broadcast %cst_43 : f32 to vector<16x1xf32>
    %173 = arith.addf %171, %172 : vector<16x1xf32>
    %174 = math.rsqrt %173 : vector<16x1xf32>
    %175 = vector.broadcast %164 : vector<16x1xf32> to vector<16x32xf32>
    %176 = arith.subf %160, %175 : vector<16x32xf32>
    %177 = vector.broadcast %174 : vector<16x1xf32> to vector<16x32xf32>
    %178 = arith.mulf %176, %177 : vector<16x32xf32>
    %179 = vector.broadcast %13 : vector<1x32xf32> to vector<16x32xf32>
    %180 = arith.mulf %178, %179 : vector<16x32xf32>
    %181 = vector.broadcast %14 : vector<1x32xf32> to vector<16x32xf32>
    %182 = arith.addf %180, %181 : vector<16x32xf32>
    %183 = vector.extract_strided_slice %182 {offsets = [0, 0], sizes = [8, 32], strides = [1, 1]} : vector<16x32xf32> to vector<8x32xf32>
    %c0_44 = arith.constant 0 : index
    %c0_45 = arith.constant 0 : index
    %184 = vector.load %arg4[%c0_44, %c0_45] : memref<8x64xf32, #tpu.memory_space<vmem>>, vector<8x32xf32>
    tpu.vector_store %arg4[%c0_44, %c0_45], %183 {strides = array<i32>} : memref<8x64xf32, #tpu.memory_space<vmem>>, vector<8x32xf32>,
    %185 = vector.extract_strided_slice %182 {offsets = [8, 0], sizes = [8, 32], strides = [1, 1]} : vector<16x32xf32> to vector<8x32xf32>
    %c0_46 = arith.constant 0 : index
    %c32_47 = arith.constant 32 : index
    %186 = vector.load %arg4[%c0_46, %c32_47] : memref<8x64xf32, #tpu.memory_space<vmem>>, vector<8x32xf32>
    tpu.vector_store %arg4[%c0_46, %c32_47], %185 {strides = array<i32>} : memref<8x64xf32, #tpu.memory_space<vmem>>, vector<8x32xf32>,
    return
  }
  func.func @transform_0(%arg0: i32) -> (i32, i32) {
    %c0_i32 = arith.constant 0 : i32
    %c0_i32_0 = arith.constant 0 : i32
    %c0_i32_1 = arith.constant 0 : i32
    return %c0_i32, %c0_i32_0 : i32, i32
  }
  func.func @transform_1(%arg0: i32) -> (i32, i32) {
    %c0_i32 = arith.constant 0 : i32
    %c0_i32_0 = arith.constant 0 : i32
    %c0_i32_1 = arith.constant 0 : i32
    return %c0_i32, %c0_i32_0 : i32, i32
  }
  func.func @transform_2(%arg0: i32) -> (i32, i32) {
    %c0_i32 = arith.constant 0 : i32
    %c0_i32_0 = arith.constant 0 : i32
    %c0_i32_1 = arith.constant 0 : i32
    return %c0_i32, %c0_i32_0 : i32, i32
  }
  func.func @transform_3(%arg0: i32) -> (i32, i32) {
    %c0_i32 = arith.constant 0 : i32
    %c0_i32_0 = arith.constant 0 : i32
    %c0_i32_1 = arith.constant 0 : i32
    return %c0_i32, %c0_i32_0 : i32, i32
  }
}

</mosaic_0001>

<llo_original>
// kernel: transformer_encoder_layer.1
$region0: #{transformer_encoder_layer.1}
  #allocation0 [shape = 'u32[]', space=smem, size = 0x4, offset = 0x4, fixed_abs, tag = 'smem constant byte address 0x4 - core index']
  #allocation1 [shape = 'u32[144,128]{1,0:T(1,128)}', space=vmem, size = 0x12000, scoped, tag = 'internal scratch']
  %s0 = inlined_call_operand.vmem [shape: f32[8,64], index: 0, kind: input, shape index: {}]
  %s1 = inlined_call_operand.hbm [shape: f32[160,96], index: 1, kind: input, shape index: {}]
  %s2 = inlined_call_operand.vmem [shape: f32[8,96], index: 2, kind: input, shape index: {}]
  %s3 = inlined_call_operand.vmem [shape: f32[8,64], index: 3, kind: output, shape index: {}]
  %s4 = sld [smem:[#allocation0]]
  $region26: #{transformer_encoder_layer.1} parent=0
    _
  %s6 = ssub.s32 1, %s4
  %s7 = scalar_select 0, %s6, %s4
  $region1: #{transformer_encoder_layer.1} parent=0
    #allocation2 [shape = 'u8[81920]{0}', space=vmem, size = 0x14000, scoped, tag = 'input window, operand 1, single buffered']
    #allocation3 [shape = 's32[1]{0}', space=sflag, size = 0x4, scoped, tag = 'scoped memory for transformer_encoder_layer.1']
    %8 = vsyncpa [#allocation3], 0
    // Predicated region
    $region2: #{transformer_encoder_layer.1} parent=1 // pred_check
      _
    $region3: #{transformer_encoder_layer.1} parent=1 // pred_check_branch
      %10 = sbr.rel (0) target = $region5
    $region4: #{transformer_encoder_layer.1} parent=1 // pred_region
      _
    $region5: #{transformer_encoder_layer.1} parent=1 // pred_fallthru
      _
    // Predicated region
    $region6: #{transformer_encoder_layer.1} parent=1 // pred_check
      _
    $region7: #{transformer_encoder_layer.1} parent=1 // pred_check_branch
      %12 = sbr.rel (0) target = $region9
    $region8: #{transformer_encoder_layer.1} parent=1 // pred_region
      %s14 = ssub.s32 2560, 2560
      %15 = vsyncadd [#allocation3], %s14
      %s16 = sshll.u32 [#allocation2], 4
      %s17 = int_to_ptr.vmem [resolvable:$true] %s16
      %22 = dma.hbm_to_vmem [thread:$0]  %s1, 2560, %s17, [#allocation3], 128, 128, 8
    $region9: #{transformer_encoder_layer.1} parent=1 // pred_fallthru
      _
    // Predicated region
    $region10: #{transformer_encoder_layer.1} parent=1 // pred_check
      _
    $region11: #{transformer_encoder_layer.1} parent=1 // pred_check_branch
      %24 = sbr.rel (0) target = $region13
    $region12: #{transformer_encoder_layer.1} parent=1 // pred_region
      _
    $region13: #{transformer_encoder_layer.1} parent=1 // pred_fallthru
      _
    // Predicated region
    $region14: #{transformer_encoder_layer.1} parent=1 // pred_check
      _
    $region15: #{transformer_encoder_layer.1} parent=1 // pred_check_branch
      %26 = sbr.rel (0) target = $region17
    $region16: #{transformer_encoder_layer.1} parent=1 // pred_region
      %27 = dma.done [#allocation3], 2560
    $region17: #{transformer_encoder_layer.1} parent=1 // pred_fallthru
      _
    %v28 = vld [vmem:[%s0] sm:$0xff]
    %30 = vrot.lane.b32.xlu0 %v28, 96
    %v31 = vpop.permute.xlu0 %30
    %v33 = vld [vmem:[#allocation2] sm:$0xff]
    %v34 = vld [vmem:[#allocation2 + $0x8] sm:$0xff]
    %v35 = vld [vmem:[#allocation2 + $0x10] sm:$0xff]
    %v36 = vld [vmem:[#allocation2 + $0x18] sm:$0xff]
    %v37 = vld [vmem:[#allocation2 + $0x20] sm:$0xff]
    %v38 = vld [vmem:[#allocation2 + $0x28] sm:$0xff]
    %v39 = vld [vmem:[#allocation2 + $0x30] sm:$0xff]
    %v40 = vld [vmem:[#allocation2 + $0x38] sm:$0xff]
    %v41 = vld [vmem:[#allocation2 + $0x40] sm:$0xff]
    %v42 = vld [vmem:[#allocation2 + $0x48] sm:$0xff]
    %v43 = vld [vmem:[#allocation2 + $0x50] sm:$0xff]
    %v44 = vld [vmem:[#allocation2 + $0x58] sm:$0xff]
    %v45 = vld [vmem:[#allocation2 + $0x60] sm:$0xff]
    %v46 = vld [vmem:[#allocation2 + $0x68] sm:$0xff]
    %v47 = vld [vmem:[#allocation2 + $0x70] sm:$0xff]
    %v48 = vld [vmem:[#allocation2 + $0x78] sm:$0xff]
    %v49 = vld [vmem:[#allocation2 + $0x80] sm:$0xff]
    %v50 = vld [vmem:[#allocation2 + $0x88] sm:$0xff]
    %v51 = vld [vmem:[#allocation2 + $0x90] sm:$0xff]
    %v52 = vld [vmem:[#allocation2 + $0x98] sm:$0xff]
    %v53 = vld [vmem:[%s2] sm:$0x1]
    %v54 = vld [vmem:[%s2 + $0x1] sm:$0x1]
    %v55 = vld [vmem:[%s2 + $0x2] sm:$0x1]
    %v56 = vld [vmem:[%s2 + $0x3] sm:$0x1]
    %v57 = vld [vmem:[%s2 + $0x4] sm:$0x1]
    %v58 = vld [vmem:[%s2 + $0x5] sm:$0x1]
    %v59 = vld [vmem:[%s2 + $0x6] sm:$0x1]
    %v60 = vld [vmem:[%s2 + $0x7] sm:$0x1]
    %v61 = vlaneseq
    %v62 = vshrl.u32 %v61, 7
    %v63 = vsub.s32 0, %v62
    %v64 = vrot.slane %v53, %v63
    %vm65 = vcmask 261120
    %v66 = vsel %vm65, %v28, 0
    %v68 = vsel %vm65, %v31, 0
    %70 = vmatprep.subr.mxu0 0.0
    %71 = vmatpush1.msra.mxu0 %v33
    %72 = vmatprep.subr.mxu0 0.0
    %73 = vmatpush1.msra.mxu0 %v34
    %74 = vmatprep.subr.mxu0 0.0
    %75 = vmatpush1.msra.mxu0 %v35
    %76 = vmatprep.subr.mxu0 0.0
    %77 = vmatpush1.msra.mxu0 %v36
    %78 = vmatprep.subr.mxu0 0.0
    %79 = vmatpush1.msra.mxu0 0.0
    %80 = vmatprep.subr.mxu0 0.0
    %81 = vmatpush1.msra.mxu0 0.0
    %82 = vmatprep.subr.mxu0 0.0
    %83 = vmatpush1.msra.mxu0 0.0
    %84 = vmatprep.subr.mxu0 0.0
    %85 = vmatpush1.msra.mxu0 0.0
    %86 = vmatprep.subr.mxu0 0.0
    %87 = vmatpush1.msra.mxu0 0.0
    %88 = vmatprep.subr.mxu0 0.0
    %89 = vmatpush1.msra.mxu0 0.0
    %90 = vmatprep.subr.mxu0 0.0
    %91 = vmatpush1.msra.mxu0 0.0
    %92 = vmatprep.subr.mxu0 0.0
    %93 = vmatpush1.msra.mxu0 0.0
    %94 = vmatprep.subr.mxu0 0.0
    %95 = vmatpush1.msra.mxu0 0.0
    %96 = vmatprep.subr.mxu0 0.0
    %97 = vmatpush1.msra.mxu0 0.0
    %98 = vmatprep.subr.mxu0 0.0
    %99 = vmatpush1.msra.mxu0 0.0
    %100 = vmatprep.subr.mxu0 0.0
    %101 = vmatpush1.msra.mxu0 0.0
    %102 = vmatprep.subr.mxu0 0.0
    %103 = vmatpush1.msra.mxu0 0.0
    %104 = vmatprep.subr.mxu0 0.0
    %105 = vmatpush1.msra.mxu0 0.0
    %106 = vmatprep.subr.mxu0 0.0
    %107 = vmatpush1.msra.mxu0 0.0
    %108 = vmatprep.subr.mxu0 0.0
    %109 = vmatpush1.msra.mxu0 0.0
    %110 = vmatprep.subr.mxu0 0.0
    %111 = vmatpush1.msra.mxu0 0.0
    %112 = vmatprep.subr.mxu0 0.0
    %113 = vmatpush1.msra.mxu0 0.0
    %114 = vmatprep.subr.mxu0 0.0
    %115 = vmatpush1.msra.mxu0 0.0
    %116 = vmatprep.subr.mxu0 0.0
    %117 = vmatpush1.msra.mxu0 0.0
    %118 = vmatprep.subr.mxu0 0.0
    %119 = vmatpush1.msra.mxu0 0.0
    %120 = vmatprep.subr.mxu0 0.0
    %121 = vmatpush1.msra.mxu0 0.0
    %122 = vmatprep.subr.mxu0 0.0
    %123 = vmatpush1.msra.mxu0 0.0
    %124 = vmatprep.subr.mxu0 0.0
    %125 = vmatpush1.msra.mxu0 0.0
    %126 = vmatprep.subr.mxu0 0.0
    %127 = vmatpush1.msra.mxu0 0.0
    %128 = vmatprep.subr.mxu0 0.0
    %129 = vmatpush1.msra.mxu0 0.0
    %130 = vmatprep.subr.mxu0 0.0
    %131 = vmatpush1.msra.mxu0 0.0
    %132 = vmatprep.subr.mxu0 0.0
    %133 = vmatpush1.msra.mxu0 0.0
    %134 = vmatprep.mubr.f32.mxu0 0.0
    %135 = vmatmul.mubr.f32.gmra.mrb[0].mxu0 %v66
    %v136 = vpop.f32.mrb[0].mxu0
    %v137 = vadd.f32 %v64, %v136
    %v138 = vpop.f32.mrb[0].mxu0
    %139 = vmatprep.mubr.f32.mxu0 0.0
    %140 = vmatmul.mubr.f32.gmra.mrb[0].mxu0 %v68
    %v141 = vpop.f32.mrb[0].mxu0
    %v142 = vadd.f32 %v64, %v141
    %v143 = vpop.f32.mrb[0].mxu0
    %144 = vdwg.mxu0
    %146 = vrot.lane.b32.xlu0 %v137, 120
    %v147 = vpop.permute.xlu0 %146
    %148 = vrot.lane.b32.xlu0 %v137, 112
    %v149 = vpop.permute.xlu0 %148
    %150 = vrot.lane.b32.xlu0 %v137, 104
    %v151 = vpop.permute.xlu0 %150
    %153 = vrot.lane.b32.xlu0 %v142, 120
    %v154 = vpop.permute.xlu0 %153
    %155 = vrot.lane.b32.xlu0 %v142, 112
    %v156 = vpop.permute.xlu0 %155
    %157 = vrot.lane.b32.xlu0 %v142, 104
    %v158 = vpop.permute.xlu0 %157
    %159 = vrot.lane.b32.xlu0 %v137, 96
    %v160 = vpop.permute.xlu0 %159
    %vm161 = vcmask 64512
    %v162 = vsel %vm161, %v137, 0
    %v164 = vsel %vm161, %v160, 0
    %166 = vmatprep.subr.mxu0 0.0
    %167 = vmatpush1.xpose.msra.mxu0 %v164
    %168 = vmatprep.subr.mxu0 0.0
    %169 = vmatpush1.xpose.msra.mxu0 0.0
    %170 = vmatprep.subr.mxu0 0.0
    %171 = vmatpush1.xpose.msra.mxu0 0.0
    %172 = vmatprep.subr.mxu0 0.0
    %173 = vmatpush1.xpose.msra.mxu0 0.0
    %174 = vmatprep.subr.mxu0 0.0
    %175 = vmatpush1.xpose.msra.mxu0 0.0
    %176 = vmatprep.subr.mxu0 0.0
    %177 = vmatpush1.xpose.msra.mxu0 0.0
    %178 = vmatprep.subr.mxu0 0.0
    %179 = vmatpush1.xpose.msra.mxu0 0.0
    %180 = vmatprep.subr.mxu0 0.0
    %181 = vmatpush1.xpose.msra.mxu0 0.0
    %182 = vmatprep.subr.mxu0 0.0
    %183 = vmatpush1.xpose.msra.mxu0 0.0
    %184 = vmatprep.subr.mxu0 0.0
    %185 = vmatpush1.xpose.msra.mxu0 0.0
    %186 = vmatprep.subr.mxu0 0.0
    %187 = vmatpush1.xpose.msra.mxu0 0.0
    %188 = vmatprep.subr.mxu0 0.0
    %189 = vmatpush1.xpose.msra.mxu0 0.0
    %190 = vmatprep.subr.mxu0 0.0
    %191 = vmatpush1.xpose.msra.mxu0 0.0
    %192 = vmatprep.subr.mxu0 0.0
    %193 = vmatpush1.xpose.msra.mxu0 0.0
    %194 = vmatprep.subr.mxu0 0.0
    %195 = vmatpush1.xpose.msra.mxu0 0.0
    %196 = vmatprep.subr.mxu0 0.0
    %197 = vmatpush1.xpose.msra.mxu0 0.0
    %198 = vmatprep.subr.mxu0 0.0
    %199 = vmatpush1.xpose.msra.mxu0 0.0
    %200 = vmatprep.subr.mxu0 0.0
    %201 = vmatpush1.xpose.msra.mxu0 0.0
    %202 = vmatprep.subr.mxu0 0.0
    %203 = vmatpush1.xpose.msra.mxu0 0.0
    %204 = vmatprep.subr.mxu0 0.0
    %205 = vmatpush1.xpose.msra.mxu0 0.0
    %206 = vmatprep.subr.mxu0 0.0
    %207 = vmatpush1.xpose.msra.mxu0 0.0
    %208 = vmatprep.subr.mxu0 0.0
    %209 = vmatpush1.xpose.msra.mxu0 0.0
    %210 = vmatprep.subr.mxu0 0.0
    %211 = vmatpush1.xpose.msra.mxu0 0.0
    %212 = vmatprep.subr.mxu0 0.0
    %213 = vmatpush1.xpose.msra.mxu0 0.0
    %214 = vmatprep.subr.mxu0 0.0
    %215 = vmatpush1.xpose.msra.mxu0 0.0
    %216 = vmatprep.subr.mxu0 0.0
    %217 = vmatpush1.xpose.msra.mxu0 0.0
    %218 = vmatprep.subr.mxu0 0.0
    %219 = vmatpush1.xpose.msra.mxu0 0.0
    %220 = vmatprep.subr.mxu0 0.0
    %221 = vmatpush1.xpose.msra.mxu0 0.0
    %222 = vmatprep.subr.mxu0 0.0
    %223 = vmatpush1.xpose.msra.mxu0 0.0
    %224 = vmatprep.subr.mxu0 0.0
    %225 = vmatpush1.xpose.msra.mxu0 0.0
    %226 = vmatprep.subr.mxu0 0.0
    %227 = vmatpush1.xpose.msra.mxu0 0.0
    %228 = vmatprep.subr.mxu0 0.0
    %229 = vmatpush1.xpose.msra.mxu0 0.0
    %230 = vmatprep.mubr.f32.mxu0 0.0
    %231 = vmatmul.mubr.f32.gmra.mrb[0].mxu0 %v162
    %v232 = vpop.f32.mrb[0].mxu0
    %v233 = vadd.f32 0.0, %v232
    %v234 = vpop.f32.mrb[0].mxu0
    %235 = vdwg.mxu0
    %236 = vrot.lane.b32.xlu0 %v147, 96
    %v237 = vpop.permute.xlu0 %236
    %v238 = vsel %vm161, %v147, 0
    %v240 = vsel %vm161, %v237, 0
    %242 = vmatprep.subr.mxu0 0.0
    %243 = vmatpush1.xpose.msra.mxu0 %v240
    %244 = vmatprep.subr.mxu0 0.0
    %245 = vmatpush1.xpose.msra.mxu0 0.0
    %246 = vmatprep.subr.mxu0 0.0
    %247 = vmatpush1.xpose.msra.mxu0 0.0
    %248 = vmatprep.subr.mxu0 0.0
    %249 = vmatpush1.xpose.msra.mxu0 0.0
    %250 = vmatprep.subr.mxu0 0.0
    %251 = vmatpush1.xpose.msra.mxu0 0.0
    %252 = vmatprep.subr.mxu0 0.0
    %253 = vmatpush1.xpose.msra.mxu0 0.0
    %254 = vmatprep.subr.mxu0 0.0
    %255 = vmatpush1.xpose.msra.mxu0 0.0
    %256 = vmatprep.subr.mxu0 0.0
    %257 = vmatpush1.xpose.msra.mxu0 0.0
    %258 = vmatprep.subr.mxu0 0.0
    %259 = vmatpush1.xpose.msra.mxu0 0.0
    %260 = vmatprep.subr.mxu0 0.0
    %261 = vmatpush1.xpose.msra.mxu0 0.0
    %262 = vmatprep.subr.mxu0 0.0
    %263 = vmatpush1.xpose.msra.mxu0 0.0
    %264 = vmatprep.subr.mxu0 0.0
    %265 = vmatpush1.xpose.msra.mxu0 0.0
    %266 = vmatprep.subr.mxu0 0.0
    %267 = vmatpush1.xpose.msra.mxu0 0.0
    %268 = vmatprep.subr.mxu0 0.0
    %269 = vmatpush1.xpose.msra.mxu0 0.0
    %270 = vmatprep.subr.mxu0 0.0
    %271 = vmatpush1.xpose.msra.mxu0 0.0
    %272 = vmatprep.subr.mxu0 0.0
    %273 = vmatpush1.xpose.msra.mxu0 0.0
    %274 = vmatprep.subr.mxu0 0.0
    %275 = vmatpush1.xpose.msra.mxu0 0.0
    %276 = vmatprep.subr.mxu0 0.0
    %277 = vmatpush1.xpose.msra.mxu0 0.0
    %278 = vmatprep.subr.mxu0 0.0
    %279 = vmatpush1.xpose.msra.mxu0 0.0
    %280 = vmatprep.subr.mxu0 0.0
    %281 = vmatpush1.xpose.msra.mxu0 0.0
    %282 = vmatprep.subr.mxu0 0.0
    %283 = vmatpush1.xpose.msra.mxu0 0.0
    %284 = vmatprep.subr.mxu0 0.0
    %285 = vmatpush1.xpose.msra.mxu0 0.0
    %286 = vmatprep.subr.mxu0 0.0
    %287 = vmatpush1.xpose.msra.mxu0 0.0
    %288 = vmatprep.subr.mxu0 0.0
    %289 = vmatpush1.xpose.msra.mxu0 0.0
    %290 = vmatprep.subr.mxu0 0.0
    %291 = vmatpush1.xpose.msra.mxu0 0.0
    %292 = vmatprep.subr.mxu0 0.0
    %293 = vmatpush1.xpose.msra.mxu0 0.0
    %294 = vmatprep.subr.mxu0 0.0
    %295 = vmatpush1.xpose.msra.mxu0 0.0
    %296 = vmatprep.subr.mxu0 0.0
    %297 = vmatpush1.xpose.msra.mxu0 0.0
    %298 = vmatprep.subr.mxu0 0.0
    %299 = vmatpush1.xpose.msra.mxu0 0.0
    %300 = vmatprep.subr.mxu0 0.0
    %301 = vmatpush1.xpose.msra.mxu0 0.0
    %302 = vmatprep.subr.mxu0 0.0
    %303 = vmatpush1.xpose.msra.mxu0 0.0
    %304 = vmatprep.subr.mxu0 0.0
    %305 = vmatpush1.xpose.msra.mxu0 0.0
    %306 = vmatprep.mubr.f32.mxu0 0.0
    %307 = vmatmul.mubr.f32.gmra.mrb[0].mxu0 %v238
    %v308 = vpop.f32.mrb[0].mxu0
    %v309 = vadd.f32 0.0, %v308
    %v310 = vpop.f32.mrb[0].mxu0
    %311 = vdwg.mxu0
    %312 = vrot.lane.b32.xlu0 %v149, 96
    %v313 = vpop.permute.xlu0 %312
    %v314 = vsel %vm161, %v149, 0
    %v316 = vsel %vm161, %v313, 0
    %318 = vmatprep.subr.mxu0 0.0
    %319 = vmatpush1.xpose.msra.mxu0 %v316
    %320 = vmatprep.subr.mxu0 0.0
    %321 = vmatpush1.xpose.msra.mxu0 0.0
    %322 = vmatprep.subr.mxu0 0.0
    %323 = vmatpush1.xpose.msra.mxu0 0.0
    %324 = vmatprep.subr.mxu0 0.0
    %325 = vmatpush1.xpose.msra.mxu0 0.0
    %326 = vmatprep.subr.mxu0 0.0
    %327 = vmatpush1.xpose.msra.mxu0 0.0
    %328 = vmatprep.subr.mxu0 0.0
    %329 = vmatpush1.xpose.msra.mxu0 0.0
    %330 = vmatprep.subr.mxu0 0.0
    %331 = vmatpush1.xpose.msra.mxu0 0.0
    %332 = vmatprep.subr.mxu0 0.0
    %333 = vmatpush1.xpose.msra.mxu0 0.0
    %334 = vmatprep.subr.mxu0 0.0
    %335 = vmatpush1.xpose.msra.mxu0 0.0
    %336 = vmatprep.subr.mxu0 0.0
    %337 = vmatpush1.xpose.msra.mxu0 0.0
    %338 = vmatprep.subr.mxu0 0.0
    %339 = vmatpush1.xpose.msra.mxu0 0.0
    %340 = vmatprep.subr.mxu0 0.0
    %341 = vmatpush1.xpose.msra.mxu0 0.0
    %342 = vmatprep.subr.mxu0 0.0
    %343 = vmatpush1.xpose.msra.mxu0 0.0
    %344 = vmatprep.subr.mxu0 0.0
    %345 = vmatpush1.xpose.msra.mxu0 0.0
    %346 = vmatprep.subr.mxu0 0.0
    %347 = vmatpush1.xpose.msra.mxu0 0.0
    %348 = vmatprep.subr.mxu0 0.0
    %349 = vmatpush1.xpose.msra.mxu0 0.0
    %350 = vmatprep.subr.mxu0 0.0
    %351 = vmatpush1.xpose.msra.mxu0 0.0
    %352 = vmatprep.subr.mxu0 0.0
    %353 = vmatpush1.xpose.msra.mxu0 0.0
    %354 = vmatprep.subr.mxu0 0.0
    %355 = vmatpush1.xpose.msra.mxu0 0.0
    %356 = vmatprep.subr.mxu0 0.0
    %357 = vmatpush1.xpose.msra.mxu0 0.0
    %358 = vmatprep.subr.mxu0 0.0
    %359 = vmatpush1.xpose.msra.mxu0 0.0
    %360 = vmatprep.subr.mxu0 0.0
    %361 = vmatpush1.xpose.msra.mxu0 0.0
    %362 = vmatprep.subr.mxu0 0.0
    %363 = vmatpush1.xpose.msra.mxu0 0.0
    %364 = vmatprep.subr.mxu0 0.0
    %365 = vmatpush1.xpose.msra.mxu0 0.0
    %366 = vmatprep.subr.mxu0 0.0
    %367 = vmatpush1.xpose.msra.mxu0 0.0
    %368 = vmatprep.subr.mxu0 0.0
    %369 = vmatpush1.xpose.msra.mxu0 0.0
    %370 = vmatprep.subr.mxu0 0.0
    %371 = vmatpush1.xpose.msra.mxu0 0.0
    %372 = vmatprep.subr.mxu0 0.0
    %373 = vmatpush1.xpose.msra.mxu0 0.0
    %374 = vmatprep.subr.mxu0 0.0
    %375 = vmatpush1.xpose.msra.mxu0 0.0
    %376 = vmatprep.subr.mxu0 0.0
    %377 = vmatpush1.xpose.msra.mxu0 0.0
    %378 = vmatprep.subr.mxu0 0.0
    %379 = vmatpush1.xpose.msra.mxu0 0.0
    %380 = vmatprep.subr.mxu0 0.0
    %381 = vmatpush1.xpose.msra.mxu0 0.0
    %382 = vmatprep.mubr.f32.mxu0 0.0
    %383 = vmatmul.mubr.f32.gmra.mrb[0].mxu0 %v314
    %v384 = vpop.f32.mrb[0].mxu0
    %v385 = vadd.f32 0.0, %v384
    %v386 = vpop.f32.mrb[0].mxu0
    %387 = vdwg.mxu0
    %388 = vrot.lane.b32.xlu0 %v151, 96
    %v389 = vpop.permute.xlu0 %388
    %v390 = vsel %vm161, %v151, 0
    %v392 = vsel %vm161, %v389, 0
    %394 = vmatprep.subr.mxu0 0.0
    %395 = vmatpush1.xpose.msra.mxu0 %v392
    %396 = vmatprep.subr.mxu0 0.0
    %397 = vmatpush1.xpose.msra.mxu0 0.0
    %398 = vmatprep.subr.mxu0 0.0
    %399 = vmatpush1.xpose.msra.mxu0 0.0
    %400 = vmatprep.subr.mxu0 0.0
    %401 = vmatpush1.xpose.msra.mxu0 0.0
    %402 = vmatprep.subr.mxu0 0.0
    %403 = vmatpush1.xpose.msra.mxu0 0.0
    %404 = vmatprep.subr.mxu0 0.0
    %405 = vmatpush1.xpose.msra.mxu0 0.0
    %406 = vmatprep.subr.mxu0 0.0
    %407 = vmatpush1.xpose.msra.mxu0 0.0
    %408 = vmatprep.subr.mxu0 0.0
    %409 = vmatpush1.xpose.msra.mxu0 0.0
    %410 = vmatprep.subr.mxu0 0.0
    %411 = vmatpush1.xpose.msra.mxu0 0.0
    %412 = vmatprep.subr.mxu0 0.0
    %413 = vmatpush1.xpose.msra.mxu0 0.0
    %414 = vmatprep.subr.mxu0 0.0
    %415 = vmatpush1.xpose.msra.mxu0 0.0
    %416 = vmatprep.subr.mxu0 0.0
    %417 = vmatpush1.xpose.msra.mxu0 0.0
    %418 = vmatprep.subr.mxu0 0.0
    %419 = vmatpush1.xpose.msra.mxu0 0.0
    %420 = vmatprep.subr.mxu0 0.0
    %421 = vmatpush1.xpose.msra.mxu0 0.0
    %422 = vmatprep.subr.mxu0 0.0
    %423 = vmatpush1.xpose.msra.mxu0 0.0
    %424 = vmatprep.subr.mxu0 0.0
    %425 = vmatpush1.xpose.msra.mxu0 0.0
    %426 = vmatprep.subr.mxu0 0.0
    %427 = vmatpush1.xpose.msra.mxu0 0.0
    %428 = vmatprep.subr.mxu0 0.0
    %429 = vmatpush1.xpose.msra.mxu0 0.0
    %430 = vmatprep.subr.mxu0 0.0
    %431 = vmatpush1.xpose.msra.mxu0 0.0
    %432 = vmatprep.subr.mxu0 0.0
    %433 = vmatpush1.xpose.msra.mxu0 0.0
    %434 = vmatprep.subr.mxu0 0.0
    %435 = vmatpush1.xpose.msra.mxu0 0.0
    %436 = vmatprep.subr.mxu0 0.0
    %437 = vmatpush1.xpose.msra.mxu0 0.0
    %438 = vmatprep.subr.mxu0 0.0
    %439 = vmatpush1.xpose.msra.mxu0 0.0
    %440 = vmatprep.subr.mxu0 0.0
    %441 = vmatpush1.xpose.msra.mxu0 0.0
    %442 = vmatprep.subr.mxu0 0.0
    %443 = vmatpush1.xpose.msra.mxu0 0.0
    %444 = vmatprep.subr.mxu0 0.0
    %445 = vmatpush1.xpose.msra.mxu0 0.0
    %446 = vmatprep.subr.mxu0 0.0
    %447 = vmatpush1.xpose.msra.mxu0 0.0
    %448 = vmatprep.subr.mxu0 0.0
    %449 = vmatpush1.xpose.msra.mxu0 0.0
    %450 = vmatprep.subr.mxu0 0.0
    %451 = vmatpush1.xpose.msra.mxu0 0.0
    %452 = vmatprep.subr.mxu0 0.0
    %453 = vmatpush1.xpose.msra.mxu0 0.0
    %454 = vmatprep.subr.mxu0 0.0
    %455 = vmatpush1.xpose.msra.mxu0 0.0
    %456 = vmatprep.subr.mxu0 0.0
    %457 = vmatpush1.xpose.msra.mxu0 0.0
    %458 = vmatprep.mubr.f32.mxu0 0.0
    %459 = vmatmul.mubr.f32.gmra.mrb[0].mxu0 %v390
    %v460 = vpop.f32.mrb[0].mxu0
    %v461 = vadd.f32 0.0, %v460
    %v462 = vpop.f32.mrb[0].mxu0
    %463 = vdwg.mxu0
    %464 = vrot.lane.b32.xlu0 %v142, 96
    %v465 = vpop.permute.xlu0 %464
    %v466 = vsel %vm161, %v142, 0
    %v468 = vsel %vm161, %v465, 0
    %470 = vmatprep.subr.mxu0 0.0
    %471 = vmatpush1.xpose.msra.mxu0 %v468
    %472 = vmatprep.subr.mxu0 0.0
    %473 = vmatpush1.xpose.msra.mxu0 0.0
    %474 = vmatprep.subr.mxu0 0.0
    %475 = vmatpush1.xpose.msra.mxu0 0.0
    %476 = vmatprep.subr.mxu0 0.0
    %477 = vmatpush1.xpose.msra.mxu0 0.0
    %478 = vmatprep.subr.mxu0 0.0
    %479 = vmatpush1.xpose.msra.mxu0 0.0
    %480 = vmatprep.subr.mxu0 0.0
    %481 = vmatpush1.xpose.msra.mxu0 0.0
    %482 = vmatprep.subr.mxu0 0.0
    %483 = vmatpush1.xpose.msra.mxu0 0.0
    %484 = vmatprep.subr.mxu0 0.0
    %485 = vmatpush1.xpose.msra.mxu0 0.0
    %486 = vmatprep.subr.mxu0 0.0
    %487 = vmatpush1.xpose.msra.mxu0 0.0
    %488 = vmatprep.subr.mxu0 0.0
    %489 = vmatpush1.xpose.msra.mxu0 0.0
    %490 = vmatprep.subr.mxu0 0.0
    %491 = vmatpush1.xpose.msra.mxu0 0.0
    %492 = vmatprep.subr.mxu0 0.0
    %493 = vmatpush1.xpose.msra.mxu0 0.0
    %494 = vmatprep.subr.mxu0 0.0
    %495 = vmatpush1.xpose.msra.mxu0 0.0
    %496 = vmatprep.subr.mxu0 0.0
    %497 = vmatpush1.xpose.msra.mxu0 0.0
    %498 = vmatprep.subr.mxu0 0.0
    %499 = vmatpush1.xpose.msra.mxu0 0.0
    %500 = vmatprep.subr.mxu0 0.0
    %501 = vmatpush1.xpose.msra.mxu0 0.0
    %502 = vmatprep.subr.mxu0 0.0
    %503 = vmatpush1.xpose.msra.mxu0 0.0
    %504 = vmatprep.subr.mxu0 0.0
    %505 = vmatpush1.xpose.msra.mxu0 0.0
    %506 = vmatprep.subr.mxu0 0.0
    %507 = vmatpush1.xpose.msra.mxu0 0.0
    %508 = vmatprep.subr.mxu0 0.0
    %509 = vmatpush1.xpose.msra.mxu0 0.0
    %510 = vmatprep.subr.mxu0 0.0
    %511 = vmatpush1.xpose.msra.mxu0 0.0
    %512 = vmatprep.subr.mxu0 0.0
    %513 = vmatpush1.xpose.msra.mxu0 0.0
    %514 = vmatprep.subr.mxu0 0.0
    %515 = vmatpush1.xpose.msra.mxu0 0.0
    %516 = vmatprep.subr.mxu0 0.0
    %517 = vmatpush1.xpose.msra.mxu0 0.0
    %518 = vmatprep.subr.mxu0 0.0
    %519 = vmatpush1.xpose.msra.mxu0 0.0
    %520 = vmatprep.subr.mxu0 0.0
    %521 = vmatpush1.xpose.msra.mxu0 0.0
    %522 = vmatprep.subr.mxu0 0.0
    %523 = vmatpush1.xpose.msra.mxu0 0.0
    %524 = vmatprep.subr.mxu0 0.0
    %525 = vmatpush1.xpose.msra.mxu0 0.0
    %526 = vmatprep.subr.mxu0 0.0
    %527 = vmatpush1.xpose.msra.mxu0 0.0
    %528 = vmatprep.subr.mxu0 0.0
    %529 = vmatpush1.xpose.msra.mxu0 0.0
    %530 = vmatprep.subr.mxu0 0.0
    %531 = vmatpush1.xpose.msra.mxu0 0.0
    %532 = vmatprep.subr.mxu0 0.0
    %533 = vmatpush1.xpose.msra.mxu0 0.0
    %534 = vmatprep.mubr.f32.mxu0 0.0
    %535 = vmatmul.mubr.f32.gmra.mrb[0].mxu0 %v466
    %v536 = vpop.f32.mrb[0].mxu0
    %v537 = vadd.f32 0.0, %v536
    %v538 = vpop.f32.mrb[0].mxu0
    %539 = vdwg.mxu0
    %540 = vrot.lane.b32.xlu0 %v154, 96
    %v541 = vpop.permute.xlu0 %540
    %v542 = vsel %vm161, %v154, 0
    %v544 = vsel %vm161, %v541, 0
    %546 = vmatprep.subr.mxu0 0.0
    %547 = vmatpush1.xpose.msra.mxu0 %v544
    %548 = vmatprep.subr.mxu0 0.0
    %549 = vmatpush1.xpose.msra.mxu0 0.0
    %550 = vmatprep.subr.mxu0 0.0
    %551 = vmatpush1.xpose.msra.mxu0 0.0
    %552 = vmatprep.subr.mxu0 0.0
    %553 = vmatpush1.xpose.msra.mxu0 0.0
    %554 = vmatprep.subr.mxu0 0.0
    %555 = vmatpush1.xpose.msra.mxu0 0.0
    %556 = vmatprep.subr.mxu0 0.0
    %557 = vmatpush1.xpose.msra.mxu0 0.0
    %558 = vmatprep.subr.mxu0 0.0
    %559 = vmatpush1.xpose.msra.mxu0 0.0
    %560 = vmatprep.subr.mxu0 0.0
    %561 = vmatpush1.xpose.msra.mxu0 0.0
    %562 = vmatprep.subr.mxu0 0.0
    %563 = vmatpush1.xpose.msra.mxu0 0.0
    %564 = vmatprep.subr.mxu0 0.0
    %565 = vmatpush1.xpose.msra.mxu0 0.0
    %566 = vmatprep.subr.mxu0 0.0
    %567 = vmatpush1.xpose.msra.mxu0 0.0
    %568 = vmatprep.subr.mxu0 0.0
    %569 = vmatpush1.xpose.msra.mxu0 0.0
    %570 = vmatprep.subr.mxu0 0.0
    %571 = vmatpush1.xpose.msra.mxu0 0.0
    %572 = vmatprep.subr.mxu0 0.0
    %573 = vmatpush1.xpose.msra.mxu0 0.0
    %574 = vmatprep.subr.mxu0 0.0
    %575 = vmatpush1.xpose.msra.mxu0 0.0
    %576 = vmatprep.subr.mxu0 0.0
    %577 = vmatpush1.xpose.msra.mxu0 0.0
    %578 = vmatprep.subr.mxu0 0.0
    %579 = vmatpush1.xpose.msra.mxu0 0.0
    %580 = vmatprep.subr.mxu0 0.0
    %581 = vmatpush1.xpose.msra.mxu0 0.0
    %582 = vmatprep.subr.mxu0 0.0
    %583 = vmatpush1.xpose.msra.mxu0 0.0
    %584 = vmatprep.subr.mxu0 0.0
    %585 = vmatpush1.xpose.msra.mxu0 0.0
    %586 = vmatprep.subr.mxu0 0.0
    %587 = vmatpush1.xpose.msra.mxu0 0.0
    %588 = vmatprep.subr.mxu0 0.0
    %589 = vmatpush1.xpose.msra.mxu0 0.0
    %590 = vmatprep.subr.mxu0 0.0
    %591 = vmatpush1.xpose.msra.mxu0 0.0
    %592 = vmatprep.subr.mxu0 0.0
    %593 = vmatpush1.xpose.msra.mxu0 0.0
    %594 = vmatprep.subr.mxu0 0.0
    %595 = vmatpush1.xpose.msra.mxu0 0.0
    %596 = vmatprep.subr.mxu0 0.0
    %597 = vmatpush1.xpose.msra.mxu0 0.0
    %598 = vmatprep.subr.mxu0 0.0
    %599 = vmatpush1.xpose.msra.mxu0 0.0
    %600 = vmatprep.subr.mxu0 0.0
    %601 = vmatpush1.xpose.msra.mxu0 0.0
    %602 = vmatprep.subr.mxu0 0.0
    %603 = vmatpush1.xpose.msra.mxu0 0.0
    %604 = vmatprep.subr.mxu0 0.0
    %605 = vmatpush1.xpose.msra.mxu0 0.0
    %606 = vmatprep.subr.mxu0 0.0
    %607 = vmatpush1.xpose.msra.mxu0 0.0
    %608 = vmatprep.subr.mxu0 0.0
    %609 = vmatpush1.xpose.msra.mxu0 0.0
    %610 = vmatprep.mubr.f32.mxu0 0.0
    %611 = vmatmul.mubr.f32.gmra.mrb[0].mxu0 %v542
    %v612 = vpop.f32.mrb[0].mxu0
    %v613 = vadd.f32 0.0, %v612
    %v614 = vpop.f32.mrb[0].mxu0
    %615 = vdwg.mxu0
    %616 = vrot.lane.b32.xlu0 %v156, 96
    %v617 = vpop.permute.xlu0 %616
    %v618 = vsel %vm161, %v156, 0
    %v620 = vsel %vm161, %v617, 0
    %622 = vmatprep.subr.mxu0 0.0
    %623 = vmatpush1.xpose.msra.mxu0 %v620
    %624 = vmatprep.subr.mxu0 0.0
    %625 = vmatpush1.xpose.msra.mxu0 0.0
    %626 = vmatprep.subr.mxu0 0.0
    %627 = vmatpush1.xpose.msra.mxu0 0.0
    %628 = vmatprep.subr.mxu0 0.0
    %629 = vmatpush1.xpose.msra.mxu0 0.0
    %630 = vmatprep.subr.mxu0 0.0
    %631 = vmatpush1.xpose.msra.mxu0 0.0
    %632 = vmatprep.subr.mxu0 0.0
    %633 = vmatpush1.xpose.msra.mxu0 0.0
    %634 = vmatprep.subr.mxu0 0.0
    %635 = vmatpush1.xpose.msra.mxu0 0.0
    %636 = vmatprep.subr.mxu0 0.0
    %637 = vmatpush1.xpose.msra.mxu0 0.0
    %638 = vmatprep.subr.mxu0 0.0
    %639 = vmatpush1.xpose.msra.mxu0 0.0
    %640 = vmatprep.subr.mxu0 0.0
    %641 = vmatpush1.xpose.msra.mxu0 0.0
    %642 = vmatprep.subr.mxu0 0.0
    %643 = vmatpush1.xpose.msra.mxu0 0.0
    %644 = vmatprep.subr.mxu0 0.0
    %645 = vmatpush1.xpose.msra.mxu0 0.0
    %646 = vmatprep.subr.mxu0 0.0
    %647 = vmatpush1.xpose.msra.mxu0 0.0
    %648 = vmatprep.subr.mxu0 0.0
    %649 = vmatpush1.xpose.msra.mxu0 0.0
    %650 = vmatprep.subr.mxu0 0.0
    %651 = vmatpush1.xpose.msra.mxu0 0.0
    %652 = vmatprep.subr.mxu0 0.0
    %653 = vmatpush1.xpose.msra.mxu0 0.0
    %654 = vmatprep.subr.mxu0 0.0
    %655 = vmatpush1.xpose.msra.mxu0 0.0
    %656 = vmatprep.subr.mxu0 0.0
    %657 = vmatpush1.xpose.msra.mxu0 0.0
    %658 = vmatprep.subr.mxu0 0.0
    %659 = vmatpush1.xpose.msra.mxu0 0.0
    %660 = vmatprep.subr.mxu0 0.0
    %661 = vmatpush1.xpose.msra.mxu0 0.0
    %662 = vmatprep.subr.mxu0 0.0
    %663 = vmatpush1.xpose.msra.mxu0 0.0
    %664 = vmatprep.subr.mxu0 0.0
    %665 = vmatpush1.xpose.msra.mxu0 0.0
    %666 = vmatprep.subr.mxu0 0.0
    %667 = vmatpush1.xpose.msra.mxu0 0.0
    %668 = vmatprep.subr.mxu0 0.0
    %669 = vmatpush1.xpose.msra.mxu0 0.0
    %670 = vmatprep.subr.mxu0 0.0
    %671 = vmatpush1.xpose.msra.mxu0 0.0
    %672 = vmatprep.subr.mxu0 0.0
    %673 = vmatpush1.xpose.msra.mxu0 0.0
    %674 = vmatprep.subr.mxu0 0.0
    %675 = vmatpush1.xpose.msra.mxu0 0.0
    %676 = vmatprep.subr.mxu0 0.0
    %677 = vmatpush1.xpose.msra.mxu0 0.0
    %678 = vmatprep.subr.mxu0 0.0
    %679 = vmatpush1.xpose.msra.mxu0 0.0
    %680 = vmatprep.subr.mxu0 0.0
    %681 = vmatpush1.xpose.msra.mxu0 0.0
    %682 = vmatprep.subr.mxu0 0.0
    %683 = vmatpush1.xpose.msra.mxu0 0.0
    %684 = vmatprep.subr.mxu0 0.0
    %685 = vmatpush1.xpose.msra.mxu0 0.0
    %686 = vmatprep.mubr.f32.mxu0 0.0
    %687 = vmatmul.mubr.f32.gmra.mrb[0].mxu0 %v618
    %v688 = vpop.f32.mrb[0].mxu0
    %v689 = vadd.f32 0.0, %v688
    %v690 = vpop.f32.mrb[0].mxu0
    %691 = vdwg.mxu0
    %692 = vrot.lane.b32.xlu0 %v158, 96
    %v693 = vpop.permute.xlu0 %692
    %v694 = vsel %vm161, %v158, 0
    %v696 = vsel %vm161, %v693, 0
    %698 = vmatprep.subr.mxu0 0.0
    %699 = vmatpush1.xpose.msra.mxu0 %v696
    %700 = vmatprep.subr.mxu0 0.0
    %701 = vmatpush1.xpose.msra.mxu0 0.0
    %702 = vmatprep.subr.mxu0 0.0
    %703 = vmatpush1.xpose.msra.mxu0 0.0
    %704 = vmatprep.subr.mxu0 0.0
    %705 = vmatpush1.xpose.msra.mxu0 0.0
    %706 = vmatprep.subr.mxu0 0.0
    %707 = vmatpush1.xpose.msra.mxu0 0.0
    %708 = vmatprep.subr.mxu0 0.0
    %709 = vmatpush1.xpose.msra.mxu0 0.0
    %710 = vmatprep.subr.mxu0 0.0
    %711 = vmatpush1.xpose.msra.mxu0 0.0
    %712 = vmatprep.subr.mxu0 0.0
    %713 = vmatpush1.xpose.msra.mxu0 0.0
    %714 = vmatprep.subr.mxu0 0.0
    %715 = vmatpush1.xpose.msra.mxu0 0.0
    %716 = vmatprep.subr.mxu0 0.0
    %717 = vmatpush1.xpose.msra.mxu0 0.0
    %718 = vmatprep.subr.mxu0 0.0
    %719 = vmatpush1.xpose.msra.mxu0 0.0
    %720 = vmatprep.subr.mxu0 0.0
    %721 = vmatpush1.xpose.msra.mxu0 0.0
    %722 = vmatprep.subr.mxu0 0.0
    %723 = vmatpush1.xpose.msra.mxu0 0.0
    %724 = vmatprep.subr.mxu0 0.0
    %725 = vmatpush1.xpose.msra.mxu0 0.0
    %726 = vmatprep.subr.mxu0 0.0
    %727 = vmatpush1.xpose.msra.mxu0 0.0
    %728 = vmatprep.subr.mxu0 0.0
    %729 = vmatpush1.xpose.msra.mxu0 0.0
    %730 = vmatprep.subr.mxu0 0.0
    %731 = vmatpush1.xpose.msra.mxu0 0.0
    %732 = vmatprep.subr.mxu0 0.0
    %733 = vmatpush1.xpose.msra.mxu0 0.0
    %734 = vmatprep.subr.mxu0 0.0
    %735 = vmatpush1.xpose.msra.mxu0 0.0
    %736 = vmatprep.subr.mxu0 0.0
    %737 = vmatpush1.xpose.msra.mxu0 0.0
    %738 = vmatprep.subr.mxu0 0.0
    %739 = vmatpush1.xpose.msra.mxu0 0.0
    %740 = vmatprep.subr.mxu0 0.0
    %741 = vmatpush1.xpose.msra.mxu0 0.0
    %742 = vmatprep.subr.mxu0 0.0
    %743 = vmatpush1.xpose.msra.mxu0 0.0
    %744 = vmatprep.subr.mxu0 0.0
    %745 = vmatpush1.xpose.msra.mxu0 0.0
    %746 = vmatprep.subr.mxu0 0.0
    %747 = vmatpush1.xpose.msra.mxu0 0.0
    %748 = vmatprep.subr.mxu0 0.0
    %749 = vmatpush1.xpose.msra.mxu0 0.0
    %750 = vmatprep.subr.mxu0 0.0
    %751 = vmatpush1.xpose.msra.mxu0 0.0
    %752 = vmatprep.subr.mxu0 0.0
    %753 = vmatpush1.xpose.msra.mxu0 0.0
    %754 = vmatprep.subr.mxu0 0.0
    %755 = vmatpush1.xpose.msra.mxu0 0.0
    %756 = vmatprep.subr.mxu0 0.0
    %757 = vmatpush1.xpose.msra.mxu0 0.0
    %758 = vmatprep.subr.mxu0 0.0
    %759 = vmatpush1.xpose.msra.mxu0 0.0
    %760 = vmatprep.subr.mxu0 0.0
    %761 = vmatpush1.xpose.msra.mxu0 0.0
    %762 = vmatprep.mubr.f32.mxu0 0.0
    %763 = vmatmul.mubr.f32.gmra.mrb[0].mxu0 %v694
    %v764 = vpop.f32.mrb[0].mxu0
    %v765 = vadd.f32 0.0, %v764
    %v766 = vpop.f32.mrb[0].mxu0
    %767 = vdwg.mxu0
    %v768 = vsel %vm161, %v233, -inf
    %769 = vmax.xlane.f32.xlu0 %v768
    %v770 = vpop.xlane.xlu0 %769
    %v771 = vsel %vm161, %v309, -inf
    %772 = vmax.xlane.f32.xlu0 %v771
    %v773 = vpop.xlane.xlu0 %772
    %v774 = vsel %vm161, %v385, -inf
    %775 = vmax.xlane.f32.xlu0 %v774
    %v776 = vpop.xlane.xlu0 %775
    %v777 = vsel %vm161, %v461, -inf
    %778 = vmax.xlane.f32.xlu0 %v777
    %v779 = vpop.xlane.xlu0 %778
    %v780 = vsel %vm161, %v537, -inf
    %781 = vmax.xlane.f32.xlu0 %v780
    %v782 = vpop.xlane.xlu0 %781
    %v783 = vsel %vm161, %v613, -inf
    %784 = vmax.xlane.f32.xlu0 %v783
    %v785 = vpop.xlane.xlu0 %784
    %v786 = vsel %vm161, %v689, -inf
    %787 = vmax.xlane.f32.xlu0 %v786
    %v788 = vpop.xlane.xlu0 %787
    %v789 = vsel %vm161, %v765, -inf
    %790 = vmax.xlane.f32.xlu0 %v789
    %v791 = vpop.xlane.xlu0 %790
    %v792 = vsub.f32 %v233, %v770
    %v793 = vsub.f32 %v309, %v773
    %v794 = vsub.f32 %v385, %v776
    %v795 = vsub.f32 %v461, %v779
    %v796 = vsub.f32 %v537, %v782
    %v797 = vsub.f32 %v613, %v785
    %v798 = vsub.f32 %v689, %v788
    %v799 = vsub.f32 %v765, %v791
    %v800 = vmul.f32 %v792, 1.442695
    %v801 = vpow.pop %v800
    %v802 = vmul.f32 %v793, 1.442695
    %v803 = vpow.pop %v802
    %v804 = vmul.f32 %v794, 1.442695
    %v805 = vpow.pop %v804
    %v806 = vmul.f32 %v795, 1.442695
    %v807 = vpow.pop %v806
    %v808 = vmul.f32 %v796, 1.442695
    %v809 = vpow.pop %v808
    %v810 = vmul.f32 %v797, 1.442695
    %v811 = vpow.pop %v810
    %v812 = vmul.f32 %v798, 1.442695
    %v813 = vpow.pop %v812
    %v814 = vmul.f32 %v799, 1.442695
    %v815 = vpow.pop %v814
    %v816 = vsel %vm161, %v801, 0.0
    %817 = vadd.xlane.f32.xlu0 %v816
    %v818 = vpop.xlane.xlu0 %817
    %v819 = vsel %vm161, %v803, 0.0
    %820 = vadd.xlane.f32.xlu0 %v819
    %v821 = vpop.xlane.xlu0 %820
    %v822 = vsel %vm161, %v805, 0.0
    %823 = vadd.xlane.f32.xlu0 %v822
    %v824 = vpop.xlane.xlu0 %823
    %v825 = vsel %vm161, %v807, 0.0
    %826 = vadd.xlane.f32.xlu0 %v825
    %v827 = vpop.xlane.xlu0 %826
    %v828 = vsel %vm161, %v809, 0.0
    %829 = vadd.xlane.f32.xlu0 %v828
    %v830 = vpop.xlane.xlu0 %829
    %v831 = vsel %vm161, %v811, 0.0
    %832 = vadd.xlane.f32.xlu0 %v831
    %v833 = vpop.xlane.xlu0 %832
    %v834 = vsel %vm161, %v813, 0.0
    %835 = vadd.xlane.f32.xlu0 %v834
    %v836 = vpop.xlane.xlu0 %835
    %v837 = vsel %vm161, %v815, 0.0
    %838 = vadd.xlane.f32.xlu0 %v837
    %v839 = vpop.xlane.xlu0 %838
    %v840 = vrcp.pop %v818
    %v841 = vrcp.pop %v821
    %v842 = vrcp.pop %v824
    %v843 = vrcp.pop %v827
    %v844 = vrcp.pop %v830
    %v845 = vrcp.pop %v833
    %v846 = vrcp.pop %v836
    %v847 = vrcp.pop %v839
    %v848 = vmul.f32 %v801, %v840
    %v849 = vmul.f32 %v803, %v841
    %v850 = vmul.f32 %v805, %v842
    %v851 = vmul.f32 %v807, %v843
    %v852 = vmul.f32 %v809, %v844
    %v853 = vmul.f32 %v811, %v845
    %v854 = vmul.f32 %v813, %v846
    %v855 = vmul.f32 %v815, %v847
    %856 = vrot.lane.b32.xlu0 %v137, 64
    %v857 = vpop.permute.xlu0 %856
    %v860 = vsel %vm161, %v848, 0
    %862 = vmatprep.subr.mxu0 0.0
    %863 = vmatpush1.msra.mxu0 %v857
    %864 = vmatprep.subr.mxu0 0.0
    %865 = vmatpush1.msra.mxu0 0.0
    %866 = vmatprep.subr.mxu0 0.0
    %867 = vmatpush1.msra.mxu0 0.0
    %868 = vmatprep.subr.mxu0 0.0
    %869 = vmatpush1.msra.mxu0 0.0
    %870 = vmatprep.subr.mxu0 0.0
    %871 = vmatpush1.msra.mxu0 0.0
    %872 = vmatprep.subr.mxu0 0.0
    %873 = vmatpush1.msra.mxu0 0.0
    %874 = vmatprep.subr.mxu0 0.0
    %875 = vmatpush1.msra.mxu0 0.0
    %876 = vmatprep.subr.mxu0 0.0
    %877 = vmatpush1.msra.mxu0 0.0
    %878 = vmatprep.subr.mxu0 0.0
    %879 = vmatpush1.msra.mxu0 0.0
    %880 = vmatprep.subr.mxu0 0.0
    %881 = vmatpush1.msra.mxu0 0.0
    %882 = vmatprep.subr.mxu0 0.0
    %883 = vmatpush1.msra.mxu0 0.0
    %884 = vmatprep.subr.mxu0 0.0
    %885 = vmatpush1.msra.mxu0 0.0
    %886 = vmatprep.subr.mxu0 0.0
    %887 = vmatpush1.msra.mxu0 0.0
    %888 = vmatprep.subr.mxu0 0.0
    %889 = vmatpush1.msra.mxu0 0.0
    %890 = vmatprep.subr.mxu0 0.0
    %891 = vmatpush1.msra.mxu0 0.0
    %892 = vmatprep.subr.mxu0 0.0
    %893 = vmatpush1.msra.mxu0 0.0
    %894 = vmatprep.subr.mxu0 0.0
    %895 = vmatpush1.msra.mxu0 0.0
    %896 = vmatprep.subr.mxu0 0.0
    %897 = vmatpush1.msra.mxu0 0.0
    %898 = vmatprep.subr.mxu0 0.0
    %899 = vmatpush1.msra.mxu0 0.0
    %900 = vmatprep.subr.mxu0 0.0
    %901 = vmatpush1.msra.mxu0 0.0
    %902 = vmatprep.subr.mxu0 0.0
    %903 = vmatpush1.msra.mxu0 0.0
    %904 = vmatprep.subr.mxu0 0.0
    %905 = vmatpush1.msra.mxu0 0.0
    %906 = vmatprep.subr.mxu0 0.0
    %907 = vmatpush1.msra.mxu0 0.0
    %908 = vmatprep.subr.mxu0 0.0
    %909 = vmatpush1.msra.mxu0 0.0
    %910 = vmatprep.subr.mxu0 0.0
    %911 = vmatpush1.msra.mxu0 0.0
    %912 = vmatprep.subr.mxu0 0.0
    %913 = vmatpush1.msra.mxu0 0.0
    %914 = vmatprep.subr.mxu0 0.0
    %915 = vmatpush1.msra.mxu0 0.0
    %916 = vmatprep.subr.mxu0 0.0
    %917 = vmatpush1.msra.mxu0 0.0
    %918 = vmatprep.subr.mxu0 0.0
    %919 = vmatpush1.msra.mxu0 0.0
    %920 = vmatprep.subr.mxu0 0.0
    %921 = vmatpush1.msra.mxu0 0.0
    %922 = vmatprep.subr.mxu0 0.0
    %923 = vmatpush1.msra.mxu0 0.0
    %924 = vmatprep.subr.mxu0 0.0
    %925 = vmatpush1.msra.mxu0 0.0
    %926 = vmatprep.mubr.f32.mxu0 0.0
    %927 = vmatmul.mubr.f32.gmra.mrb[0].mxu0 %v860
    %v928 = vpop.f32.mrb[0].mxu0
    %v929 = vadd.f32 0.0, %v928
    %v930 = vpop.f32.mrb[0].mxu0
    %931 = vdwg.mxu0
    %932 = vrot.lane.b32.xlu0 %v147, 64
    %v933 = vpop.permute.xlu0 %932
    %v936 = vsel %vm161, %v849, 0
    %938 = vmatprep.subr.mxu0 0.0
    %939 = vmatpush1.msra.mxu0 %v933
    %940 = vmatprep.subr.mxu0 0.0
    %941 = vmatpush1.msra.mxu0 0.0
    %942 = vmatprep.subr.mxu0 0.0
    %943 = vmatpush1.msra.mxu0 0.0
    %944 = vmatprep.subr.mxu0 0.0
    %945 = vmatpush1.msra.mxu0 0.0
    %946 = vmatprep.subr.mxu0 0.0
    %947 = vmatpush1.msra.mxu0 0.0
    %948 = vmatprep.subr.mxu0 0.0
    %949 = vmatpush1.msra.mxu0 0.0
    %950 = vmatprep.subr.mxu0 0.0
    %951 = vmatpush1.msra.mxu0 0.0
    %952 = vmatprep.subr.mxu0 0.0
    %953 = vmatpush1.msra.mxu0 0.0
    %954 = vmatprep.subr.mxu0 0.0
    %955 = vmatpush1.msra.mxu0 0.0
    %956 = vmatprep.subr.mxu0 0.0
    %957 = vmatpush1.msra.mxu0 0.0
    %958 = vmatprep.subr.mxu0 0.0
    %959 = vmatpush1.msra.mxu0 0.0
    %960 = vmatprep.subr.mxu0 0.0
    %961 = vmatpush1.msra.mxu0 0.0
    %962 = vmatprep.subr.mxu0 0.0
    %963 = vmatpush1.msra.mxu0 0.0
    %964 = vmatprep.subr.mxu0 0.0
    %965 = vmatpush1.msra.mxu0 0.0
    %966 = vmatprep.subr.mxu0 0.0
    %967 = vmatpush1.msra.mxu0 0.0
    %968 = vmatprep.subr.mxu0 0.0
    %969 = vmatpush1.msra.mxu0 0.0
    %970 = vmatprep.subr.mxu0 0.0
    %971 = vmatpush1.msra.mxu0 0.0
    %972 = vmatprep.subr.mxu0 0.0
    %973 = vmatpush1.msra.mxu0 0.0
    %974 = vmatprep.subr.mxu0 0.0
    %975 = vmatpush1.msra.mxu0 0.0
    %976 = vmatprep.subr.mxu0 0.0
    %977 = vmatpush1.msra.mxu0 0.0
    %978 = vmatprep.subr.mxu0 0.0
    %979 = vmatpush1.msra.mxu0 0.0
    %980 = vmatprep.subr.mxu0 0.0
    %981 = vmatpush1.msra.mxu0 0.0
    %982 = vmatprep.subr.mxu0 0.0
    %983 = vmatpush1.msra.mxu0 0.0
    %984 = vmatprep.subr.mxu0 0.0
    %985 = vmatpush1.msra.mxu0 0.0
    %986 = vmatprep.subr.mxu0 0.0
    %987 = vmatpush1.msra.mxu0 0.0
    %988 = vmatprep.subr.mxu0 0.0
    %989 = vmatpush1.msra.mxu0 0.0
    %990 = vmatprep.subr.mxu0 0.0
    %991 = vmatpush1.msra.mxu0 0.0
    %992 = vmatprep.subr.mxu0 0.0
    %993 = vmatpush1.msra.mxu0 0.0
    %994 = vmatprep.subr.mxu0 0.0
    %995 = vmatpush1.msra.mxu0 0.0
    %996 = vmatprep.subr.mxu0 0.0
    %997 = vmatpush1.msra.mxu0 0.0
    %998 = vmatprep.subr.mxu0 0.0
    %999 = vmatpush1.msra.mxu0 0.0
    %1000 = vmatprep.subr.mxu0 0.0
    %1001 = vmatpush1.msra.mxu0 0.0
    %1002 = vmatprep.mubr.f32.mxu0 0.0
    %1003 = vmatmul.mubr.f32.gmra.mrb[0].mxu0 %v936
    %v1004 = vpop.f32.mrb[0].mxu0
    %v1005 = vadd.f32 0.0, %v1004
    %v1006 = vpop.f32.mrb[0].mxu0
    %1007 = vdwg.mxu0
    %1008 = vrot.lane.b32.xlu0 %v149, 64
    %v1009 = vpop.permute.xlu0 %1008
    %v1012 = vsel %vm161, %v850, 0
    %1014 = vmatprep.subr.mxu0 0.0
    %1015 = vmatpush1.msra.mxu0 %v1009
    %1016 = vmatprep.subr.mxu0 0.0
    %1017 = vmatpush1.msra.mxu0 0.0
    %1018 = vmatprep.subr.mxu0 0.0
    %1019 = vmatpush1.msra.mxu0 0.0
    %1020 = vmatprep.subr.mxu0 0.0
    %1021 = vmatpush1.msra.mxu0 0.0
    %1022 = vmatprep.subr.mxu0 0.0
    %1023 = vmatpush1.msra.mxu0 0.0
    %1024 = vmatprep.subr.mxu0 0.0
    %1025 = vmatpush1.msra.mxu0 0.0
    %1026 = vmatprep.subr.mxu0 0.0
    %1027 = vmatpush1.msra.mxu0 0.0
    %1028 = vmatprep.subr.mxu0 0.0
    %1029 = vmatpush1.msra.mxu0 0.0
    %1030 = vmatprep.subr.mxu0 0.0
    %1031 = vmatpush1.msra.mxu0 0.0
    %1032 = vmatprep.subr.mxu0 0.0
    %1033 = vmatpush1.msra.mxu0 0.0
    %1034 = vmatprep.subr.mxu0 0.0
    %1035 = vmatpush1.msra.mxu0 0.0
    %1036 = vmatprep.subr.mxu0 0.0
    %1037 = vmatpush1.msra.mxu0 0.0
    %1038 = vmatprep.subr.mxu0 0.0
    %1039 = vmatpush1.msra.mxu0 0.0
    %1040 = vmatprep.subr.mxu0 0.0
    %1041 = vmatpush1.msra.mxu0 0.0
    %1042 = vmatprep.subr.mxu0 0.0
    %1043 = vmatpush1.msra.mxu0 0.0
    %1044 = vmatprep.subr.mxu0 0.0
    %1045 = vmatpush1.msra.mxu0 0.0
    %1046 = vmatprep.subr.mxu0 0.0
    %1047 = vmatpush1.msra.mxu0 0.0
    %1048 = vmatprep.subr.mxu0 0.0
    %1049 = vmatpush1.msra.mxu0 0.0
    %1050 = vmatprep.subr.mxu0 0.0
    %1051 = vmatpush1.msra.mxu0 0.0
    %1052 = vmatprep.subr.mxu0 0.0
    %1053 = vmatpush1.msra.mxu0 0.0
    %1054 = vmatprep.subr.mxu0 0.0
    %1055 = vmatpush1.msra.mxu0 0.0
    %1056 = vmatprep.subr.mxu0 0.0
    %1057 = vmatpush1.msra.mxu0 0.0
    %1058 = vmatprep.subr.mxu0 0.0
    %1059 = vmatpush1.msra.mxu0 0.0
    %1060 = vmatprep.subr.mxu0 0.0
    %1061 = vmatpush1.msra.mxu0 0.0
    %1062 = vmatprep.subr.mxu0 0.0
    %1063 = vmatpush1.msra.mxu0 0.0
    %1064 = vmatprep.subr.mxu0 0.0
    %1065 = vmatpush1.msra.mxu0 0.0
    %1066 = vmatprep.subr.mxu0 0.0
    %1067 = vmatpush1.msra.mxu0 0.0
    %1068 = vmatprep.subr.mxu0 0.0
    %1069 = vmatpush1.msra.mxu0 0.0
    %1070 = vmatprep.subr.mxu0 0.0
    %1071 = vmatpush1.msra.mxu0 0.0
    %1072 = vmatprep.subr.mxu0 0.0
    %1073 = vmatpush1.msra.mxu0 0.0
    %1074 = vmatprep.subr.mxu0 0.0
    %1075 = vmatpush1.msra.mxu0 0.0
    %1076 = vmatprep.subr.mxu0 0.0
    %1077 = vmatpush1.msra.mxu0 0.0
    %1078 = vmatprep.mubr.f32.mxu0 0.0
    %1079 = vmatmul.mubr.f32.gmra.mrb[0].mxu0 %v1012
    %v1080 = vpop.f32.mrb[0].mxu0
    %v1081 = vadd.f32 0.0, %v1080
    %v1082 = vpop.f32.mrb[0].mxu0
    %1083 = vdwg.mxu0
    %1084 = vrot.lane.b32.xlu0 %v151, 64
    %v1085 = vpop.permute.xlu0 %1084
    %v1088 = vsel %vm161, %v851, 0
    %1090 = vmatprep.subr.mxu0 0.0
    %1091 = vmatpush1.msra.mxu0 %v1085
    %1092 = vmatprep.subr.mxu0 0.0
    %1093 = vmatpush1.msra.mxu0 0.0
    %1094 = vmatprep.subr.mxu0 0.0
    %1095 = vmatpush1.msra.mxu0 0.0
    %1096 = vmatprep.subr.mxu0 0.0
    %1097 = vmatpush1.msra.mxu0 0.0
    %1098 = vmatprep.subr.mxu0 0.0
    %1099 = vmatpush1.msra.mxu0 0.0
    %1100 = vmatprep.subr.mxu0 0.0
    %1101 = vmatpush1.msra.mxu0 0.0
    %1102 = vmatprep.subr.mxu0 0.0
    %1103 = vmatpush1.msra.mxu0 0.0
    %1104 = vmatprep.subr.mxu0 0.0
    %1105 = vmatpush1.msra.mxu0 0.0
    %1106 = vmatprep.subr.mxu0 0.0
    %1107 = vmatpush1.msra.mxu0 0.0
    %1108 = vmatprep.subr.mxu0 0.0
    %1109 = vmatpush1.msra.mxu0 0.0
    %1110 = vmatprep.subr.mxu0 0.0
    %1111 = vmatpush1.msra.mxu0 0.0
    %1112 = vmatprep.subr.mxu0 0.0
    %1113 = vmatpush1.msra.mxu0 0.0
    %1114 = vmatprep.subr.mxu0 0.0
    %1115 = vmatpush1.msra.mxu0 0.0
    %1116 = vmatprep.subr.mxu0 0.0
    %1117 = vmatpush1.msra.mxu0 0.0
    %1118 = vmatprep.subr.mxu0 0.0
    %1119 = vmatpush1.msra.mxu0 0.0
    %1120 = vmatprep.subr.mxu0 0.0
    %1121 = vmatpush1.msra.mxu0 0.0
    %1122 = vmatprep.subr.mxu0 0.0
    %1123 = vmatpush1.msra.mxu0 0.0
    %1124 = vmatprep.subr.mxu0 0.0
    %1125 = vmatpush1.msra.mxu0 0.0
    %1126 = vmatprep.subr.mxu0 0.0
    %1127 = vmatpush1.msra.mxu0 0.0
    %1128 = vmatprep.subr.mxu0 0.0
    %1129 = vmatpush1.msra.mxu0 0.0
    %1130 = vmatprep.subr.mxu0 0.0
    %1131 = vmatpush1.msra.mxu0 0.0
    %1132 = vmatprep.subr.mxu0 0.0
    %1133 = vmatpush1.msra.mxu0 0.0
    %1134 = vmatprep.subr.mxu0 0.0
    %1135 = vmatpush1.msra.mxu0 0.0
    %1136 = vmatprep.subr.mxu0 0.0
    %1137 = vmatpush1.msra.mxu0 0.0
    %1138 = vmatprep.subr.mxu0 0.0
    %1139 = vmatpush1.msra.mxu0 0.0
    %1140 = vmatprep.subr.mxu0 0.0
    %1141 = vmatpush1.msra.mxu0 0.0
    %1142 = vmatprep.subr.mxu0 0.0
    %1143 = vmatpush1.msra.mxu0 0.0
    %1144 = vmatprep.subr.mxu0 0.0
    %1145 = vmatpush1.msra.mxu0 0.0
    %1146 = vmatprep.subr.mxu0 0.0
    %1147 = vmatpush1.msra.mxu0 0.0
    %1148 = vmatprep.subr.mxu0 0.0
    %1149 = vmatpush1.msra.mxu0 0.0
    %1150 = vmatprep.subr.mxu0 0.0
    %1151 = vmatpush1.msra.mxu0 0.0
    %1152 = vmatprep.subr.mxu0 0.0
    %1153 = vmatpush1.msra.mxu0 0.0
    %1154 = vmatprep.mubr.f32.mxu0 0.0
    %1155 = vmatmul.mubr.f32.gmra.mrb[0].mxu0 %v1088
    %v1156 = vpop.f32.mrb[0].mxu0
    %v1157 = vadd.f32 0.0, %v1156
    %v1158 = vpop.f32.mrb[0].mxu0
    %1159 = vdwg.mxu0
    %1160 = vrot.lane.b32.xlu0 %v142, 64
    %v1161 = vpop.permute.xlu0 %1160
    %v1164 = vsel %vm161, %v852, 0
    %1166 = vmatprep.subr.mxu0 0.0
    %1167 = vmatpush1.msra.mxu0 %v1161
    %1168 = vmatprep.subr.mxu0 0.0
    %1169 = vmatpush1.msra.mxu0 0.0
    %1170 = vmatprep.subr.mxu0 0.0
    %1171 = vmatpush1.msra.mxu0 0.0
    %1172 = vmatprep.subr.mxu0 0.0
    %1173 = vmatpush1.msra.mxu0 0.0
    %1174 = vmatprep.subr.mxu0 0.0
    %1175 = vmatpush1.msra.mxu0 0.0
    %1176 = vmatprep.subr.mxu0 0.0
    %1177 = vmatpush1.msra.mxu0 0.0
    %1178 = vmatprep.subr.mxu0 0.0
    %1179 = vmatpush1.msra.mxu0 0.0
    %1180 = vmatprep.subr.mxu0 0.0
    %1181 = vmatpush1.msra.mxu0 0.0
    %1182 = vmatprep.subr.mxu0 0.0
    %1183 = vmatpush1.msra.mxu0 0.0
    %1184 = vmatprep.subr.mxu0 0.0
    %1185 = vmatpush1.msra.mxu0 0.0
    %1186 = vmatprep.subr.mxu0 0.0
    %1187 = vmatpush1.msra.mxu0 0.0
    %1188 = vmatprep.subr.mxu0 0.0
    %1189 = vmatpush1.msra.mxu0 0.0
    %1190 = vmatprep.subr.mxu0 0.0
    %1191 = vmatpush1.msra.mxu0 0.0
    %1192 = vmatprep.subr.mxu0 0.0
    %1193 = vmatpush1.msra.mxu0 0.0
    %1194 = vmatprep.subr.mxu0 0.0
    %1195 = vmatpush1.msra.mxu0 0.0
    %1196 = vmatprep.subr.mxu0 0.0
    %1197 = vmatpush1.msra.mxu0 0.0
    %1198 = vmatprep.subr.mxu0 0.0
    %1199 = vmatpush1.msra.mxu0 0.0
    %1200 = vmatprep.subr.mxu0 0.0
    %1201 = vmatpush1.msra.mxu0 0.0
    %1202 = vmatprep.subr.mxu0 0.0
    %1203 = vmatpush1.msra.mxu0 0.0
    %1204 = vmatprep.subr.mxu0 0.0
    %1205 = vmatpush1.msra.mxu0 0.0
    %1206 = vmatprep.subr.mxu0 0.0
    %1207 = vmatpush1.msra.mxu0 0.0
    %1208 = vmatprep.subr.mxu0 0.0
    %1209 = vmatpush1.msra.mxu0 0.0
    %1210 = vmatprep.subr.mxu0 0.0
    %1211 = vmatpush1.msra.mxu0 0.0
    %1212 = vmatprep.subr.mxu0 0.0
    %1213 = vmatpush1.msra.mxu0 0.0
    %1214 = vmatprep.subr.mxu0 0.0
    %1215 = vmatpush1.msra.mxu0 0.0
    %1216 = vmatprep.subr.mxu0 0.0
    %1217 = vmatpush1.msra.mxu0 0.0
    %1218 = vmatprep.subr.mxu0 0.0
    %1219 = vmatpush1.msra.mxu0 0.0
    %1220 = vmatprep.subr.mxu0 0.0
    %1221 = vmatpush1.msra.mxu0 0.0
    %1222 = vmatprep.subr.mxu0 0.0
    %1223 = vmatpush1.msra.mxu0 0.0
    %1224 = vmatprep.subr.mxu0 0.0
    %1225 = vmatpush1.msra.mxu0 0.0
    %1226 = vmatprep.subr.mxu0 0.0
    %1227 = vmatpush1.msra.mxu0 0.0
    %1228 = vmatprep.subr.mxu0 0.0
    %1229 = vmatpush1.msra.mxu0 0.0
    %1230 = vmatprep.mubr.f32.mxu0 0.0
    %1231 = vmatmul.mubr.f32.gmra.mrb[0].mxu0 %v1164
    %v1232 = vpop.f32.mrb[0].mxu0
    %v1233 = vadd.f32 0.0, %v1232
    %v1234 = vpop.f32.mrb[0].mxu0
    %1235 = vdwg.mxu0
    %1236 = vrot.lane.b32.xlu0 %v154, 64
    %v1237 = vpop.permute.xlu0 %1236
    %v1240 = vsel %vm161, %v853, 0
    %1242 = vmatprep.subr.mxu0 0.0
    %1243 = vmatpush1.msra.mxu0 %v1237
    %1244 = vmatprep.subr.mxu0 0.0
    %1245 = vmatpush1.msra.mxu0 0.0
    %1246 = vmatprep.subr.mxu0 0.0
    %1247 = vmatpush1.msra.mxu0 0.0
    %1248 = vmatprep.subr.mxu0 0.0
    %1249 = vmatpush1.msra.mxu0 0.0
    %1250 = vmatprep.subr.mxu0 0.0
    %1251 = vmatpush1.msra.mxu0 0.0
    %1252 = vmatprep.subr.mxu0 0.0
    %1253 = vmatpush1.msra.mxu0 0.0
    %1254 = vmatprep.subr.mxu0 0.0
    %1255 = vmatpush1.msra.mxu0 0.0
    %1256 = vmatprep.subr.mxu0 0.0
    %1257 = vmatpush1.msra.mxu0 0.0
    %1258 = vmatprep.subr.mxu0 0.0
    %1259 = vmatpush1.msra.mxu0 0.0
    %1260 = vmatprep.subr.mxu0 0.0
    %1261 = vmatpush1.msra.mxu0 0.0
    %1262 = vmatprep.subr.mxu0 0.0
    %1263 = vmatpush1.msra.mxu0 0.0
    %1264 = vmatprep.subr.mxu0 0.0
    %1265 = vmatpush1.msra.mxu0 0.0
    %1266 = vmatprep.subr.mxu0 0.0
    %1267 = vmatpush1.msra.mxu0 0.0
    %1268 = vmatprep.subr.mxu0 0.0
    %1269 = vmatpush1.msra.mxu0 0.0
    %1270 = vmatprep.subr.mxu0 0.0
    %1271 = vmatpush1.msra.mxu0 0.0
    %1272 = vmatprep.subr.mxu0 0.0
    %1273 = vmatpush1.msra.mxu0 0.0
    %1274 = vmatprep.subr.mxu0 0.0
    %1275 = vmatpush1.msra.mxu0 0.0
    %1276 = vmatprep.subr.mxu0 0.0
    %1277 = vmatpush1.msra.mxu0 0.0
    %1278 = vmatprep.subr.mxu0 0.0
    %1279 = vmatpush1.msra.mxu0 0.0
    %1280 = vmatprep.subr.mxu0 0.0
    %1281 = vmatpush1.msra.mxu0 0.0
    %1282 = vmatprep.subr.mxu0 0.0
    %1283 = vmatpush1.msra.mxu0 0.0
    %1284 = vmatprep.subr.mxu0 0.0
    %1285 = vmatpush1.msra.mxu0 0.0
    %1286 = vmatprep.subr.mxu0 0.0
    %1287 = vmatpush1.msra.mxu0 0.0
    %1288 = vmatprep.subr.mxu0 0.0
    %1289 = vmatpush1.msra.mxu0 0.0
    %1290 = vmatprep.subr.mxu0 0.0
    %1291 = vmatpush1.msra.mxu0 0.0
    %1292 = vmatprep.subr.mxu0 0.0
    %1293 = vmatpush1.msra.mxu0 0.0
    %1294 = vmatprep.subr.mxu0 0.0
    %1295 = vmatpush1.msra.mxu0 0.0
    %1296 = vmatprep.subr.mxu0 0.0
    %1297 = vmatpush1.msra.mxu0 0.0
    %1298 = vmatprep.subr.mxu0 0.0
    %1299 = vmatpush1.msra.mxu0 0.0
    %1300 = vmatprep.subr.mxu0 0.0
    %1301 = vmatpush1.msra.mxu0 0.0
    %1302 = vmatprep.subr.mxu0 0.0
    %1303 = vmatpush1.msra.mxu0 0.0
    %1304 = vmatprep.subr.mxu0 0.0
    %1305 = vmatpush1.msra.mxu0 0.0
    %1306 = vmatprep.mubr.f32.mxu0 0.0
    %1307 = vmatmul.mubr.f32.gmra.mrb[0].mxu0 %v1240
    %v1308 = vpop.f32.mrb[0].mxu0
    %v1309 = vadd.f32 0.0, %v1308
    %v1310 = vpop.f32.mrb[0].mxu0
    %1311 = vdwg.mxu0
    %1312 = vrot.lane.b32.xlu0 %v156, 64
    %v1313 = vpop.permute.xlu0 %1312
    %v1316 = vsel %vm161, %v854, 0
    %1318 = vmatprep.subr.mxu0 0.0
    %1319 = vmatpush1.msra.mxu0 %v1313
    %1320 = vmatprep.subr.mxu0 0.0
    %1321 = vmatpush1.msra.mxu0 0.0
    %1322 = vmatprep.subr.mxu0 0.0
    %1323 = vmatpush1.msra.mxu0 0.0
    %1324 = vmatprep.subr.mxu0 0.0
    %1325 = vmatpush1.msra.mxu0 0.0
    %1326 = vmatprep.subr.mxu0 0.0
    %1327 = vmatpush1.msra.mxu0 0.0
    %1328 = vmatprep.subr.mxu0 0.0
    %1329 = vmatpush1.msra.mxu0 0.0
    %1330 = vmatprep.subr.mxu0 0.0
    %1331 = vmatpush1.msra.mxu0 0.0
    %1332 = vmatprep.subr.mxu0 0.0
    %1333 = vmatpush1.msra.mxu0 0.0
    %1334 = vmatprep.subr.mxu0 0.0
    %1335 = vmatpush1.msra.mxu0 0.0
    %1336 = vmatprep.subr.mxu0 0.0
    %1337 = vmatpush1.msra.mxu0 0.0
    %1338 = vmatprep.subr.mxu0 0.0
    %1339 = vmatpush1.msra.mxu0 0.0
    %1340 = vmatprep.subr.mxu0 0.0
    %1341 = vmatpush1.msra.mxu0 0.0
    %1342 = vmatprep.subr.mxu0 0.0
    %1343 = vmatpush1.msra.mxu0 0.0
    %1344 = vmatprep.subr.mxu0 0.0
    %1345 = vmatpush1.msra.mxu0 0.0
    %1346 = vmatprep.subr.mxu0 0.0
    %1347 = vmatpush1.msra.mxu0 0.0
    %1348 = vmatprep.subr.mxu0 0.0
    %1349 = vmatpush1.msra.mxu0 0.0
    %1350 = vmatprep.subr.mxu0 0.0
    %1351 = vmatpush1.msra.mxu0 0.0
    %1352 = vmatprep.subr.mxu0 0.0
    %1353 = vmatpush1.msra.mxu0 0.0
    %1354 = vmatprep.subr.mxu0 0.0
    %1355 = vmatpush1.msra.mxu0 0.0
    %1356 = vmatprep.subr.mxu0 0.0
    %1357 = vmatpush1.msra.mxu0 0.0
    %1358 = vmatprep.subr.mxu0 0.0
    %1359 = vmatpush1.msra.mxu0 0.0
    %1360 = vmatprep.subr.mxu0 0.0
    %1361 = vmatpush1.msra.mxu0 0.0
    %1362 = vmatprep.subr.mxu0 0.0
    %1363 = vmatpush1.msra.mxu0 0.0
    %1364 = vmatprep.subr.mxu0 0.0
    %1365 = vmatpush1.msra.mxu0 0.0
    %1366 = vmatprep.subr.mxu0 0.0
    %1367 = vmatpush1.msra.mxu0 0.0
    %1368 = vmatprep.subr.mxu0 0.0
    %1369 = vmatpush1.msra.mxu0 0.0
    %1370 = vmatprep.subr.mxu0 0.0
    %1371 = vmatpush1.msra.mxu0 0.0
    %1372 = vmatprep.subr.mxu0 0.0
    %1373 = vmatpush1.msra.mxu0 0.0
    %1374 = vmatprep.subr.mxu0 0.0
    %1375 = vmatpush1.msra.mxu0 0.0
    %1376 = vmatprep.subr.mxu0 0.0
    %1377 = vmatpush1.msra.mxu0 0.0
    %1378 = vmatprep.subr.mxu0 0.0
    %1379 = vmatpush1.msra.mxu0 0.0
    %1380 = vmatprep.subr.mxu0 0.0
    %1381 = vmatpush1.msra.mxu0 0.0
    %1382 = vmatprep.mubr.f32.mxu0 0.0
    %1383 = vmatmul.mubr.f32.gmra.mrb[0].mxu0 %v1316
    %v1384 = vpop.f32.mrb[0].mxu0
    %v1385 = vadd.f32 0.0, %v1384
    %v1386 = vpop.f32.mrb[0].mxu0
    %1387 = vdwg.mxu0
    %1388 = vrot.lane.b32.xlu0 %v158, 64
    %v1389 = vpop.permute.xlu0 %1388
    %v1392 = vsel %vm161, %v855, 0
    %1394 = vmatprep.subr.mxu0 0.0
    %1395 = vmatpush1.msra.mxu0 %v1389
    %1396 = vmatprep.subr.mxu0 0.0
    %1397 = vmatpush1.msra.mxu0 0.0
    %1398 = vmatprep.subr.mxu0 0.0
    %1399 = vmatpush1.msra.mxu0 0.0
    %1400 = vmatprep.subr.mxu0 0.0
    %1401 = vmatpush1.msra.mxu0 0.0
    %1402 = vmatprep.subr.mxu0 0.0
    %1403 = vmatpush1.msra.mxu0 0.0
    %1404 = vmatprep.subr.mxu0 0.0
    %1405 = vmatpush1.msra.mxu0 0.0
    %1406 = vmatprep.subr.mxu0 0.0
    %1407 = vmatpush1.msra.mxu0 0.0
    %1408 = vmatprep.subr.mxu0 0.0
    %1409 = vmatpush1.msra.mxu0 0.0
    %1410 = vmatprep.subr.mxu0 0.0
    %1411 = vmatpush1.msra.mxu0 0.0
    %1412 = vmatprep.subr.mxu0 0.0
    %1413 = vmatpush1.msra.mxu0 0.0
    %1414 = vmatprep.subr.mxu0 0.0
    %1415 = vmatpush1.msra.mxu0 0.0
    %1416 = vmatprep.subr.mxu0 0.0
    %1417 = vmatpush1.msra.mxu0 0.0
    %1418 = vmatprep.subr.mxu0 0.0
    %1419 = vmatpush1.msra.mxu0 0.0
    %1420 = vmatprep.subr.mxu0 0.0
    %1421 = vmatpush1.msra.mxu0 0.0
    %1422 = vmatprep.subr.mxu0 0.0
    %1423 = vmatpush1.msra.mxu0 0.0
    %1424 = vmatprep.subr.mxu0 0.0
    %1425 = vmatpush1.msra.mxu0 0.0
    %1426 = vmatprep.subr.mxu0 0.0
    %1427 = vmatpush1.msra.mxu0 0.0
    %1428 = vmatprep.subr.mxu0 0.0
    %1429 = vmatpush1.msra.mxu0 0.0
    %1430 = vmatprep.subr.mxu0 0.0
    %1431 = vmatpush1.msra.mxu0 0.0
    %1432 = vmatprep.subr.mxu0 0.0
    %1433 = vmatpush1.msra.mxu0 0.0
    %1434 = vmatprep.subr.mxu0 0.0
    %1435 = vmatpush1.msra.mxu0 0.0
    %1436 = vmatprep.subr.mxu0 0.0
    %1437 = vmatpush1.msra.mxu0 0.0
    %1438 = vmatprep.subr.mxu0 0.0
    %1439 = vmatpush1.msra.mxu0 0.0
    %1440 = vmatprep.subr.mxu0 0.0
    %1441 = vmatpush1.msra.mxu0 0.0
    %1442 = vmatprep.subr.mxu0 0.0
    %1443 = vmatpush1.msra.mxu0 0.0
    %1444 = vmatprep.subr.mxu0 0.0
    %1445 = vmatpush1.msra.mxu0 0.0
    %1446 = vmatprep.subr.mxu0 0.0
    %1447 = vmatpush1.msra.mxu0 0.0
    %1448 = vmatprep.subr.mxu0 0.0
    %1449 = vmatpush1.msra.mxu0 0.0
    %1450 = vmatprep.subr.mxu0 0.0
    %1451 = vmatpush1.msra.mxu0 0.0
    %1452 = vmatprep.subr.mxu0 0.0
    %1453 = vmatpush1.msra.mxu0 0.0
    %1454 = vmatprep.subr.mxu0 0.0
    %1455 = vmatpush1.msra.mxu0 0.0
    %1456 = vmatprep.subr.mxu0 0.0
    %1457 = vmatpush1.msra.mxu0 0.0
    %1458 = vmatprep.mubr.f32.mxu0 0.0
    %1459 = vmatmul.mubr.f32.gmra.mrb[0].mxu0 %v1392
    %v1460 = vpop.f32.mrb[0].mxu0
    %v1461 = vadd.f32 0.0, %v1460
    %v1462 = vpop.f32.mrb[0].mxu0
    %1463 = vdwg.mxu0
    %v1465 = vsel %vm161, %v1005, 0
    %1467 = vmatprep.subr.mxu0 0.0
    %1468 = vmatpush1.msra.mxu0 %v38
    %1469 = vmatprep.subr.mxu0 0.0
    %1470 = vmatpush1.msra.mxu0 0.0
    %1471 = vmatprep.subr.mxu0 0.0
    %1472 = vmatpush1.msra.mxu0 0.0
    %1473 = vmatprep.subr.mxu0 0.0
    %1474 = vmatpush1.msra.mxu0 0.0
    %1475 = vmatprep.subr.mxu0 0.0
    %1476 = vmatpush1.msra.mxu0 0.0
    %1477 = vmatprep.subr.mxu0 0.0
    %1478 = vmatpush1.msra.mxu0 0.0
    %1479 = vmatprep.subr.mxu0 0.0
    %1480 = vmatpush1.msra.mxu0 0.0
    %1481 = vmatprep.subr.mxu0 0.0
    %1482 = vmatpush1.msra.mxu0 0.0
    %1483 = vmatprep.subr.mxu0 0.0
    %1484 = vmatpush1.msra.mxu0 0.0
    %1485 = vmatprep.subr.mxu0 0.0
    %1486 = vmatpush1.msra.mxu0 0.0
    %1487 = vmatprep.subr.mxu0 0.0
    %1488 = vmatpush1.msra.mxu0 0.0
    %1489 = vmatprep.subr.mxu0 0.0
    %1490 = vmatpush1.msra.mxu0 0.0
    %1491 = vmatprep.subr.mxu0 0.0
    %1492 = vmatpush1.msra.mxu0 0.0
    %1493 = vmatprep.subr.mxu0 0.0
    %1494 = vmatpush1.msra.mxu0 0.0
    %1495 = vmatprep.subr.mxu0 0.0
    %1496 = vmatpush1.msra.mxu0 0.0
    %1497 = vmatprep.subr.mxu0 0.0
    %1498 = vmatpush1.msra.mxu0 0.0
    %1499 = vmatprep.subr.mxu0 0.0
    %1500 = vmatpush1.msra.mxu0 0.0
    %1501 = vmatprep.subr.mxu0 0.0
    %1502 = vmatpush1.msra.mxu0 0.0
    %1503 = vmatprep.subr.mxu0 0.0
    %1504 = vmatpush1.msra.mxu0 0.0
    %1505 = vmatprep.subr.mxu0 0.0
    %1506 = vmatpush1.msra.mxu0 0.0
    %1507 = vmatprep.subr.mxu0 0.0
    %1508 = vmatpush1.msra.mxu0 0.0
    %1509 = vmatprep.subr.mxu0 0.0
    %1510 = vmatpush1.msra.mxu0 0.0
    %1511 = vmatprep.subr.mxu0 0.0
    %1512 = vmatpush1.msra.mxu0 0.0
    %1513 = vmatprep.subr.mxu0 0.0
    %1514 = vmatpush1.msra.mxu0 0.0
    %1515 = vmatprep.subr.mxu0 0.0
    %1516 = vmatpush1.msra.mxu0 0.0
    %1517 = vmatprep.subr.mxu0 0.0
    %1518 = vmatpush1.msra.mxu0 0.0
    %1519 = vmatprep.subr.mxu0 0.0
    %1520 = vmatpush1.msra.mxu0 0.0
    %1521 = vmatprep.subr.mxu0 0.0
    %1522 = vmatpush1.msra.mxu0 0.0
    %1523 = vmatprep.subr.mxu0 0.0
    %1524 = vmatpush1.msra.mxu0 0.0
    %1525 = vmatprep.subr.mxu0 0.0
    %1526 = vmatpush1.msra.mxu0 0.0
    %1527 = vmatprep.subr.mxu0 0.0
    %1528 = vmatpush1.msra.mxu0 0.0
    %1529 = vmatprep.subr.mxu0 0.0
    %1530 = vmatpush1.msra.mxu0 0.0
    %1531 = vmatprep.mubr.f32.mxu0 0.0
    %1532 = vmatmul.mubr.f32.gmra.mrb[0].mxu0 %v1465
    %v1533 = vpop.f32.mrb[0].mxu0
    %v1534 = vadd.f32 0.0, %v1533
    %v1535 = vpop.f32.mrb[0].mxu0
    %1536 = vdwg.mxu0
    %v1538 = vsel %vm161, %v929, 0
    %1540 = vmatprep.subr.mxu0 0.0
    %1541 = vmatpush1.msra.mxu0 %v37
    %1542 = vmatprep.subr.mxu0 0.0
    %1543 = vmatpush1.msra.mxu0 0.0
    %1544 = vmatprep.subr.mxu0 0.0
    %1545 = vmatpush1.msra.mxu0 0.0
    %1546 = vmatprep.subr.mxu0 0.0
    %1547 = vmatpush1.msra.mxu0 0.0
    %1548 = vmatprep.subr.mxu0 0.0
    %1549 = vmatpush1.msra.mxu0 0.0
    %1550 = vmatprep.subr.mxu0 0.0
    %1551 = vmatpush1.msra.mxu0 0.0
    %1552 = vmatprep.subr.mxu0 0.0
    %1553 = vmatpush1.msra.mxu0 0.0
    %1554 = vmatprep.subr.mxu0 0.0
    %1555 = vmatpush1.msra.mxu0 0.0
    %1556 = vmatprep.subr.mxu0 0.0
    %1557 = vmatpush1.msra.mxu0 0.0
    %1558 = vmatprep.subr.mxu0 0.0
    %1559 = vmatpush1.msra.mxu0 0.0
    %1560 = vmatprep.subr.mxu0 0.0
    %1561 = vmatpush1.msra.mxu0 0.0
    %1562 = vmatprep.subr.mxu0 0.0
    %1563 = vmatpush1.msra.mxu0 0.0
    %1564 = vmatprep.subr.mxu0 0.0
    %1565 = vmatpush1.msra.mxu0 0.0
    %1566 = vmatprep.subr.mxu0 0.0
    %1567 = vmatpush1.msra.mxu0 0.0
    %1568 = vmatprep.subr.mxu0 0.0
    %1569 = vmatpush1.msra.mxu0 0.0
    %1570 = vmatprep.subr.mxu0 0.0
    %1571 = vmatpush1.msra.mxu0 0.0
    %1572 = vmatprep.subr.mxu0 0.0
    %1573 = vmatpush1.msra.mxu0 0.0
    %1574 = vmatprep.subr.mxu0 0.0
    %1575 = vmatpush1.msra.mxu0 0.0
    %1576 = vmatprep.subr.mxu0 0.0
    %1577 = vmatpush1.msra.mxu0 0.0
    %1578 = vmatprep.subr.mxu0 0.0
    %1579 = vmatpush1.msra.mxu0 0.0
    %1580 = vmatprep.subr.mxu0 0.0
    %1581 = vmatpush1.msra.mxu0 0.0
    %1582 = vmatprep.subr.mxu0 0.0
    %1583 = vmatpush1.msra.mxu0 0.0
    %1584 = vmatprep.subr.mxu0 0.0
    %1585 = vmatpush1.msra.mxu0 0.0
    %1586 = vmatprep.subr.mxu0 0.0
    %1587 = vmatpush1.msra.mxu0 0.0
    %1588 = vmatprep.subr.mxu0 0.0
    %1589 = vmatpush1.msra.mxu0 0.0
    %1590 = vmatprep.subr.mxu0 0.0
    %1591 = vmatpush1.msra.mxu0 0.0
    %1592 = vmatprep.subr.mxu0 0.0
    %1593 = vmatpush1.msra.mxu0 0.0
    %1594 = vmatprep.subr.mxu0 0.0
    %1595 = vmatpush1.msra.mxu0 0.0
    %1596 = vmatprep.subr.mxu0 0.0
    %1597 = vmatpush1.msra.mxu0 0.0
    %1598 = vmatprep.subr.mxu0 0.0
    %1599 = vmatpush1.msra.mxu0 0.0
    %1600 = vmatprep.subr.mxu0 0.0
    %1601 = vmatpush1.msra.mxu0 0.0
    %1602 = vmatprep.subr.mxu0 0.0
    %1603 = vmatpush1.msra.mxu0 0.0
    %1604 = vmatprep.mubr.f32.mxu0 0.0
    %1605 = vmatmul.mubr.f32.gmra.mrb[0].mxu0 %v1538
    %v1606 = vpop.f32.mrb[0].mxu0
    %v1607 = vadd.f32 %v1534, %v1606
    %v1608 = vpop.f32.mrb[0].mxu0
    %1609 = vdwg.mxu0
    %v1611 = vsel %vm161, %v1081, 0
    %1613 = vmatprep.subr.mxu0 0.0
    %1614 = vmatpush1.msra.mxu0 %v39
    %1615 = vmatprep.subr.mxu0 0.0
    %1616 = vmatpush1.msra.mxu0 0.0
    %1617 = vmatprep.subr.mxu0 0.0
    %1618 = vmatpush1.msra.mxu0 0.0
    %1619 = vmatprep.subr.mxu0 0.0
    %1620 = vmatpush1.msra.mxu0 0.0
    %1621 = vmatprep.subr.mxu0 0.0
    %1622 = vmatpush1.msra.mxu0 0.0
    %1623 = vmatprep.subr.mxu0 0.0
    %1624 = vmatpush1.msra.mxu0 0.0
    %1625 = vmatprep.subr.mxu0 0.0
    %1626 = vmatpush1.msra.mxu0 0.0
    %1627 = vmatprep.subr.mxu0 0.0
    %1628 = vmatpush1.msra.mxu0 0.0
    %1629 = vmatprep.subr.mxu0 0.0
    %1630 = vmatpush1.msra.mxu0 0.0
    %1631 = vmatprep.subr.mxu0 0.0
    %1632 = vmatpush1.msra.mxu0 0.0
    %1633 = vmatprep.subr.mxu0 0.0
    %1634 = vmatpush1.msra.mxu0 0.0
    %1635 = vmatprep.subr.mxu0 0.0
    %1636 = vmatpush1.msra.mxu0 0.0
    %1637 = vmatprep.subr.mxu0 0.0
    %1638 = vmatpush1.msra.mxu0 0.0
    %1639 = vmatprep.subr.mxu0 0.0
    %1640 = vmatpush1.msra.mxu0 0.0
    %1641 = vmatprep.subr.mxu0 0.0
    %1642 = vmatpush1.msra.mxu0 0.0
    %1643 = vmatprep.subr.mxu0 0.0
    %1644 = vmatpush1.msra.mxu0 0.0
    %1645 = vmatprep.subr.mxu0 0.0
    %1646 = vmatpush1.msra.mxu0 0.0
    %1647 = vmatprep.subr.mxu0 0.0
    %1648 = vmatpush1.msra.mxu0 0.0
    %1649 = vmatprep.subr.mxu0 0.0
    %1650 = vmatpush1.msra.mxu0 0.0
    %1651 = vmatprep.subr.mxu0 0.0
    %1652 = vmatpush1.msra.mxu0 0.0
    %1653 = vmatprep.subr.mxu0 0.0
    %1654 = vmatpush1.msra.mxu0 0.0
    %1655 = vmatprep.subr.mxu0 0.0
    %1656 = vmatpush1.msra.mxu0 0.0
    %1657 = vmatprep.subr.mxu0 0.0
    %1658 = vmatpush1.msra.mxu0 0.0
    %1659 = vmatprep.subr.mxu0 0.0
    %1660 = vmatpush1.msra.mxu0 0.0
    %1661 = vmatprep.subr.mxu0 0.0
    %1662 = vmatpush1.msra.mxu0 0.0
    %1663 = vmatprep.subr.mxu0 0.0
    %1664 = vmatpush1.msra.mxu0 0.0
    %1665 = vmatprep.subr.mxu0 0.0
    %1666 = vmatpush1.msra.mxu0 0.0
    %1667 = vmatprep.subr.mxu0 0.0
    %1668 = vmatpush1.msra.mxu0 0.0
    %1669 = vmatprep.subr.mxu0 0.0
    %1670 = vmatpush1.msra.mxu0 0.0
    %1671 = vmatprep.subr.mxu0 0.0
    %1672 = vmatpush1.msra.mxu0 0.0
    %1673 = vmatprep.subr.mxu0 0.0
    %1674 = vmatpush1.msra.mxu0 0.0
    %1675 = vmatprep.subr.mxu0 0.0
    %1676 = vmatpush1.msra.mxu0 0.0
    %1677 = vmatprep.mubr.f32.mxu0 0.0
    %1678 = vmatmul.mubr.f32.gmra.mrb[0].mxu0 %v1611
    %v1679 = vpop.f32.mrb[0].mxu0
    %v1680 = vadd.f32 0.0, %v1679
    %v1681 = vpop.f32.mrb[0].mxu0
    %1682 = vdwg.mxu0
    %v1683 = vadd.f32 %v1607, %v1680
    %v1685 = vsel %vm161, %v1157, 0
    %1687 = vmatprep.subr.mxu0 0.0
    %1688 = vmatpush1.msra.mxu0 %v40
    %1689 = vmatprep.subr.mxu0 0.0
    %1690 = vmatpush1.msra.mxu0 0.0
    %1691 = vmatprep.subr.mxu0 0.0
    %1692 = vmatpush1.msra.mxu0 0.0
    %1693 = vmatprep.subr.mxu0 0.0
    %1694 = vmatpush1.msra.mxu0 0.0
    %1695 = vmatprep.subr.mxu0 0.0
    %1696 = vmatpush1.msra.mxu0 0.0
    %1697 = vmatprep.subr.mxu0 0.0
    %1698 = vmatpush1.msra.mxu0 0.0
    %1699 = vmatprep.subr.mxu0 0.0
    %1700 = vmatpush1.msra.mxu0 0.0
    %1701 = vmatprep.subr.mxu0 0.0
    %1702 = vmatpush1.msra.mxu0 0.0
    %1703 = vmatprep.subr.mxu0 0.0
    %1704 = vmatpush1.msra.mxu0 0.0
    %1705 = vmatprep.subr.mxu0 0.0
    %1706 = vmatpush1.msra.mxu0 0.0
    %1707 = vmatprep.subr.mxu0 0.0
    %1708 = vmatpush1.msra.mxu0 0.0
    %1709 = vmatprep.subr.mxu0 0.0
    %1710 = vmatpush1.msra.mxu0 0.0
    %1711 = vmatprep.subr.mxu0 0.0
    %1712 = vmatpush1.msra.mxu0 0.0
    %1713 = vmatprep.subr.mxu0 0.0
    %1714 = vmatpush1.msra.mxu0 0.0
    %1715 = vmatprep.subr.mxu0 0.0
    %1716 = vmatpush1.msra.mxu0 0.0
    %1717 = vmatprep.subr.mxu0 0.0
    %1718 = vmatpush1.msra.mxu0 0.0
    %1719 = vmatprep.subr.mxu0 0.0
    %1720 = vmatpush1.msra.mxu0 0.0
    %1721 = vmatprep.subr.mxu0 0.0
    %1722 = vmatpush1.msra.mxu0 0.0
    %1723 = vmatprep.subr.mxu0 0.0
    %1724 = vmatpush1.msra.mxu0 0.0
    %1725 = vmatprep.subr.mxu0 0.0
    %1726 = vmatpush1.msra.mxu0 0.0
    %1727 = vmatprep.subr.mxu0 0.0
    %1728 = vmatpush1.msra.mxu0 0.0
    %1729 = vmatprep.subr.mxu0 0.0
    %1730 = vmatpush1.msra.mxu0 0.0
    %1731 = vmatprep.subr.mxu0 0.0
    %1732 = vmatpush1.msra.mxu0 0.0
    %1733 = vmatprep.subr.mxu0 0.0
    %1734 = vmatpush1.msra.mxu0 0.0
    %1735 = vmatprep.subr.mxu0 0.0
    %1736 = vmatpush1.msra.mxu0 0.0
    %1737 = vmatprep.subr.mxu0 0.0
    %1738 = vmatpush1.msra.mxu0 0.0
    %1739 = vmatprep.subr.mxu0 0.0
    %1740 = vmatpush1.msra.mxu0 0.0
    %1741 = vmatprep.subr.mxu0 0.0
    %1742 = vmatpush1.msra.mxu0 0.0
    %1743 = vmatprep.subr.mxu0 0.0
    %1744 = vmatpush1.msra.mxu0 0.0
    %1745 = vmatprep.subr.mxu0 0.0
    %1746 = vmatpush1.msra.mxu0 0.0
    %1747 = vmatprep.subr.mxu0 0.0
    %1748 = vmatpush1.msra.mxu0 0.0
    %1749 = vmatprep.subr.mxu0 0.0
    %1750 = vmatpush1.msra.mxu0 0.0
    %1751 = vmatprep.mubr.f32.mxu0 0.0
    %1752 = vmatmul.mubr.f32.gmra.mrb[0].mxu0 %v1685
    %v1753 = vpop.f32.mrb[0].mxu0
    %v1754 = vadd.f32 0.0, %v1753
    %v1755 = vpop.f32.mrb[0].mxu0
    %1756 = vdwg.mxu0
    %v1757 = vadd.f32 %v1683, %v1754
    %v1759 = vsel %vm161, %v1309, 0
    %1761 = vmatprep.subr.mxu0 0.0
    %1762 = vmatpush1.msra.mxu0 %v38
    %1763 = vmatprep.subr.mxu0 0.0
    %1764 = vmatpush1.msra.mxu0 0.0
    %1765 = vmatprep.subr.mxu0 0.0
    %1766 = vmatpush1.msra.mxu0 0.0
    %1767 = vmatprep.subr.mxu0 0.0
    %1768 = vmatpush1.msra.mxu0 0.0
    %1769 = vmatprep.subr.mxu0 0.0
    %1770 = vmatpush1.msra.mxu0 0.0
    %1771 = vmatprep.subr.mxu0 0.0
    %1772 = vmatpush1.msra.mxu0 0.0
    %1773 = vmatprep.subr.mxu0 0.0
    %1774 = vmatpush1.msra.mxu0 0.0
    %1775 = vmatprep.subr.mxu0 0.0
    %1776 = vmatpush1.msra.mxu0 0.0
    %1777 = vmatprep.subr.mxu0 0.0
    %1778 = vmatpush1.msra.mxu0 0.0
    %1779 = vmatprep.subr.mxu0 0.0
    %1780 = vmatpush1.msra.mxu0 0.0
    %1781 = vmatprep.subr.mxu0 0.0
    %1782 = vmatpush1.msra.mxu0 0.0
    %1783 = vmatprep.subr.mxu0 0.0
    %1784 = vmatpush1.msra.mxu0 0.0
    %1785 = vmatprep.subr.mxu0 0.0
    %1786 = vmatpush1.msra.mxu0 0.0
    %1787 = vmatprep.subr.mxu0 0.0
    %1788 = vmatpush1.msra.mxu0 0.0
    %1789 = vmatprep.subr.mxu0 0.0
    %1790 = vmatpush1.msra.mxu0 0.0
    %1791 = vmatprep.subr.mxu0 0.0
    %1792 = vmatpush1.msra.mxu0 0.0
    %1793 = vmatprep.subr.mxu0 0.0
    %1794 = vmatpush1.msra.mxu0 0.0
    %1795 = vmatprep.subr.mxu0 0.0
    %1796 = vmatpush1.msra.mxu0 0.0
    %1797 = vmatprep.subr.mxu0 0.0
    %1798 = vmatpush1.msra.mxu0 0.0
    %1799 = vmatprep.subr.mxu0 0.0
    %1800 = vmatpush1.msra.mxu0 0.0
    %1801 = vmatprep.subr.mxu0 0.0
    %1802 = vmatpush1.msra.mxu0 0.0
    %1803 = vmatprep.subr.mxu0 0.0
    %1804 = vmatpush1.msra.mxu0 0.0
    %1805 = vmatprep.subr.mxu0 0.0
    %1806 = vmatpush1.msra.mxu0 0.0
    %1807 = vmatprep.subr.mxu0 0.0
    %1808 = vmatpush1.msra.mxu0 0.0
    %1809 = vmatprep.subr.mxu0 0.0
    %1810 = vmatpush1.msra.mxu0 0.0
    %1811 = vmatprep.subr.mxu0 0.0
    %1812 = vmatpush1.msra.mxu0 0.0
    %1813 = vmatprep.subr.mxu0 0.0
    %1814 = vmatpush1.msra.mxu0 0.0
    %1815 = vmatprep.subr.mxu0 0.0
    %1816 = vmatpush1.msra.mxu0 0.0
    %1817 = vmatprep.subr.mxu0 0.0
    %1818 = vmatpush1.msra.mxu0 0.0
    %1819 = vmatprep.subr.mxu0 0.0
    %1820 = vmatpush1.msra.mxu0 0.0
    %1821 = vmatprep.subr.mxu0 0.0
    %1822 = vmatpush1.msra.mxu0 0.0
    %1823 = vmatprep.subr.mxu0 0.0
    %1824 = vmatpush1.msra.mxu0 0.0
    %1825 = vmatprep.mubr.f32.mxu0 0.0
    %1826 = vmatmul.mubr.f32.gmra.mrb[0].mxu0 %v1759
    %v1827 = vpop.f32.mrb[0].mxu0
    %v1828 = vadd.f32 0.0, %v1827
    %v1829 = vpop.f32.mrb[0].mxu0
    %1830 = vdwg.mxu0
    %v1832 = vsel %vm161, %v1233, 0
    %1834 = vmatprep.subr.mxu0 0.0
    %1835 = vmatpush1.msra.mxu0 %v37
    %1836 = vmatprep.subr.mxu0 0.0
    %1837 = vmatpush1.msra.mxu0 0.0
    %1838 = vmatprep.subr.mxu0 0.0
    %1839 = vmatpush1.msra.mxu0 0.0
    %1840 = vmatprep.subr.mxu0 0.0
    %1841 = vmatpush1.msra.mxu0 0.0
    %1842 = vmatprep.subr.mxu0 0.0
    %1843 = vmatpush1.msra.mxu0 0.0
    %1844 = vmatprep.subr.mxu0 0.0
    %1845 = vmatpush1.msra.mxu0 0.0
    %1846 = vmatprep.subr.mxu0 0.0
    %1847 = vmatpush1.msra.mxu0 0.0
    %1848 = vmatprep.subr.mxu0 0.0
    %1849 = vmatpush1.msra.mxu0 0.0
    %1850 = vmatprep.subr.mxu0 0.0
    %1851 = vmatpush1.msra.mxu0 0.0
    %1852 = vmatprep.subr.mxu0 0.0
    %1853 = vmatpush1.msra.mxu0 0.0
    %1854 = vmatprep.subr.mxu0 0.0
    %1855 = vmatpush1.msra.mxu0 0.0
    %1856 = vmatprep.subr.mxu0 0.0
    %1857 = vmatpush1.msra.mxu0 0.0
    %1858 = vmatprep.subr.mxu0 0.0
    %1859 = vmatpush1.msra.mxu0 0.0
    %1860 = vmatprep.subr.mxu0 0.0
    %1861 = vmatpush1.msra.mxu0 0.0
    %1862 = vmatprep.subr.mxu0 0.0
    %1863 = vmatpush1.msra.mxu0 0.0
    %1864 = vmatprep.subr.mxu0 0.0
    %1865 = vmatpush1.msra.mxu0 0.0
    %1866 = vmatprep.subr.mxu0 0.0
    %1867 = vmatpush1.msra.mxu0 0.0
    %1868 = vmatprep.subr.mxu0 0.0
    %1869 = vmatpush1.msra.mxu0 0.0
    %1870 = vmatprep.subr.mxu0 0.0
    %1871 = vmatpush1.msra.mxu0 0.0
    %1872 = vmatprep.subr.mxu0 0.0
    %1873 = vmatpush1.msra.mxu0 0.0
    %1874 = vmatprep.subr.mxu0 0.0
    %1875 = vmatpush1.msra.mxu0 0.0
    %1876 = vmatprep.subr.mxu0 0.0
    %1877 = vmatpush1.msra.mxu0 0.0
    %1878 = vmatprep.subr.mxu0 0.0
    %1879 = vmatpush1.msra.mxu0 0.0
    %1880 = vmatprep.subr.mxu0 0.0
    %1881 = vmatpush1.msra.mxu0 0.0
    %1882 = vmatprep.subr.mxu0 0.0
    %1883 = vmatpush1.msra.mxu0 0.0
    %1884 = vmatprep.subr.mxu0 0.0
    %1885 = vmatpush1.msra.mxu0 0.0
    %1886 = vmatprep.subr.mxu0 0.0
    %1887 = vmatpush1.msra.mxu0 0.0
    %1888 = vmatprep.subr.mxu0 0.0
    %1889 = vmatpush1.msra.mxu0 0.0
    %1890 = vmatprep.subr.mxu0 0.0
    %1891 = vmatpush1.msra.mxu0 0.0
    %1892 = vmatprep.subr.mxu0 0.0
    %1893 = vmatpush1.msra.mxu0 0.0
    %1894 = vmatprep.subr.mxu0 0.0
    %1895 = vmatpush1.msra.mxu0 0.0
    %1896 = vmatprep.subr.mxu0 0.0
    %1897 = vmatpush1.msra.mxu0 0.0
    %1898 = vmatprep.mubr.f32.mxu0 0.0
    %1899 = vmatmul.mubr.f32.gmra.mrb[0].mxu0 %v1832
    %v1900 = vpop.f32.mrb[0].mxu0
    %v1901 = vadd.f32 %v1828, %v1900
    %v1902 = vpop.f32.mrb[0].mxu0
    %1903 = vdwg.mxu0
    %v1905 = vsel %vm161, %v1385, 0
    %1907 = vmatprep.subr.mxu0 0.0
    %1908 = vmatpush1.msra.mxu0 %v39
    %1909 = vmatprep.subr.mxu0 0.0
    %1910 = vmatpush1.msra.mxu0 0.0
    %1911 = vmatprep.subr.mxu0 0.0
    %1912 = vmatpush1.msra.mxu0 0.0
    %1913 = vmatprep.subr.mxu0 0.0
    %1914 = vmatpush1.msra.mxu0 0.0
    %1915 = vmatprep.subr.mxu0 0.0
    %1916 = vmatpush1.msra.mxu0 0.0
    %1917 = vmatprep.subr.mxu0 0.0
    %1918 = vmatpush1.msra.mxu0 0.0
    %1919 = vmatprep.subr.mxu0 0.0
    %1920 = vmatpush1.msra.mxu0 0.0
    %1921 = vmatprep.subr.mxu0 0.0
    %1922 = vmatpush1.msra.mxu0 0.0
    %1923 = vmatprep.subr.mxu0 0.0
    %1924 = vmatpush1.msra.mxu0 0.0
    %1925 = vmatprep.subr.mxu0 0.0
    %1926 = vmatpush1.msra.mxu0 0.0
    %1927 = vmatprep.subr.mxu0 0.0
    %1928 = vmatpush1.msra.mxu0 0.0
    %1929 = vmatprep.subr.mxu0 0.0
    %1930 = vmatpush1.msra.mxu0 0.0
    %1931 = vmatprep.subr.mxu0 0.0
    %1932 = vmatpush1.msra.mxu0 0.0
    %1933 = vmatprep.subr.mxu0 0.0
    %1934 = vmatpush1.msra.mxu0 0.0
    %1935 = vmatprep.subr.mxu0 0.0
    %1936 = vmatpush1.msra.mxu0 0.0
    %1937 = vmatprep.subr.mxu0 0.0
    %1938 = vmatpush1.msra.mxu0 0.0
    %1939 = vmatprep.subr.mxu0 0.0
    %1940 = vmatpush1.msra.mxu0 0.0
    %1941 = vmatprep.subr.mxu0 0.0
    %1942 = vmatpush1.msra.mxu0 0.0
    %1943 = vmatprep.subr.mxu0 0.0
    %1944 = vmatpush1.msra.mxu0 0.0
    %1945 = vmatprep.subr.mxu0 0.0
    %1946 = vmatpush1.msra.mxu0 0.0
    %1947 = vmatprep.subr.mxu0 0.0
    %1948 = vmatpush1.msra.mxu0 0.0
    %1949 = vmatprep.subr.mxu0 0.0
    %1950 = vmatpush1.msra.mxu0 0.0
    %1951 = vmatprep.subr.mxu0 0.0
    %1952 = vmatpush1.msra.mxu0 0.0
    %1953 = vmatprep.subr.mxu0 0.0
    %1954 = vmatpush1.msra.mxu0 0.0
    %1955 = vmatprep.subr.mxu0 0.0
    %1956 = vmatpush1.msra.mxu0 0.0
    %1957 = vmatprep.subr.mxu0 0.0
    %1958 = vmatpush1.msra.mxu0 0.0
    %1959 = vmatprep.subr.mxu0 0.0
    %1960 = vmatpush1.msra.mxu0 0.0
    %1961 = vmatprep.subr.mxu0 0.0
    %1962 = vmatpush1.msra.mxu0 0.0
    %1963 = vmatprep.subr.mxu0 0.0
    %1964 = vmatpush1.msra.mxu0 0.0
    %1965 = vmatprep.subr.mxu0 0.0
    %1966 = vmatpush1.msra.mxu0 0.0
    %1967 = vmatprep.subr.mxu0 0.0
    %1968 = vmatpush1.msra.mxu0 0.0
    %1969 = vmatprep.subr.mxu0 0.0
    %1970 = vmatpush1.msra.mxu0 0.0
    %1971 = vmatprep.mubr.f32.mxu0 0.0
    %1972 = vmatmul.mubr.f32.gmra.mrb[0].mxu0 %v1905
    %v1973 = vpop.f32.mrb[0].mxu0
    %v1974 = vadd.f32 0.0, %v1973
    %v1975 = vpop.f32.mrb[0].mxu0
    %1976 = vdwg.mxu0
    %v1977 = vadd.f32 %v1901, %v1974
    %v1979 = vsel %vm161, %v1461, 0
    %1981 = vmatprep.subr.mxu0 0.0
    %1982 = vmatpush1.msra.mxu0 %v40
    %1983 = vmatprep.subr.mxu0 0.0
    %1984 = vmatpush1.msra.mxu0 0.0
    %1985 = vmatprep.subr.mxu0 0.0
    %1986 = vmatpush1.msra.mxu0 0.0
    %1987 = vmatprep.subr.mxu0 0.0
    %1988 = vmatpush1.msra.mxu0 0.0
    %1989 = vmatprep.subr.mxu0 0.0
    %1990 = vmatpush1.msra.mxu0 0.0
    %1991 = vmatprep.subr.mxu0 0.0
    %1992 = vmatpush1.msra.mxu0 0.0
    %1993 = vmatprep.subr.mxu0 0.0
    %1994 = vmatpush1.msra.mxu0 0.0
    %1995 = vmatprep.subr.mxu0 0.0
    %1996 = vmatpush1.msra.mxu0 0.0
    %1997 = vmatprep.subr.mxu0 0.0
    %1998 = vmatpush1.msra.mxu0 0.0
    %1999 = vmatprep.subr.mxu0 0.0
    %2000 = vmatpush1.msra.mxu0 0.0
    %2001 = vmatprep.subr.mxu0 0.0
    %2002 = vmatpush1.msra.mxu0 0.0
    %2003 = vmatprep.subr.mxu0 0.0
    %2004 = vmatpush1.msra.mxu0 0.0
    %2005 = vmatprep.subr.mxu0 0.0
    %2006 = vmatpush1.msra.mxu0 0.0
    %2007 = vmatprep.subr.mxu0 0.0
    %2008 = vmatpush1.msra.mxu0 0.0
    %2009 = vmatprep.subr.mxu0 0.0
    %2010 = vmatpush1.msra.mxu0 0.0
    %2011 = vmatprep.subr.mxu0 0.0
    %2012 = vmatpush1.msra.mxu0 0.0
    %2013 = vmatprep.subr.mxu0 0.0
    %2014 = vmatpush1.msra.mxu0 0.0
    %2015 = vmatprep.subr.mxu0 0.0
    %2016 = vmatpush1.msra.mxu0 0.0
    %2017 = vmatprep.subr.mxu0 0.0
    %2018 = vmatpush1.msra.mxu0 0.0
    %2019 = vmatprep.subr.mxu0 0.0
    %2020 = vmatpush1.msra.mxu0 0.0
    %2021 = vmatprep.subr.mxu0 0.0
    %2022 = vmatpush1.msra.mxu0 0.0
    %2023 = vmatprep.subr.mxu0 0.0
    %2024 = vmatpush1.msra.mxu0 0.0
    %2025 = vmatprep.subr.mxu0 0.0
    %2026 = vmatpush1.msra.mxu0 0.0
    %2027 = vmatprep.subr.mxu0 0.0
    %2028 = vmatpush1.msra.mxu0 0.0
    %2029 = vmatprep.subr.mxu0 0.0
    %2030 = vmatpush1.msra.mxu0 0.0
    %2031 = vmatprep.subr.mxu0 0.0
    %2032 = vmatpush1.msra.mxu0 0.0
    %2033 = vmatprep.subr.mxu0 0.0
    %2034 = vmatpush1.msra.mxu0 0.0
    %2035 = vmatprep.subr.mxu0 0.0
    %2036 = vmatpush1.msra.mxu0 0.0
    %2037 = vmatprep.subr.mxu0 0.0
    %2038 = vmatpush1.msra.mxu0 0.0
    %2039 = vmatprep.subr.mxu0 0.0
    %2040 = vmatpush1.msra.mxu0 0.0
    %2041 = vmatprep.subr.mxu0 0.0
    %2042 = vmatpush1.msra.mxu0 0.0
    %2043 = vmatprep.subr.mxu0 0.0
    %2044 = vmatpush1.msra.mxu0 0.0
    %2045 = vmatprep.mubr.f32.mxu0 0.0
    %2046 = vmatmul.mubr.f32.gmra.mrb[0].mxu0 %v1979
    %v2047 = vpop.f32.mrb[0].mxu0
    %v2048 = vadd.f32 0.0, %v2047
    %v2049 = vpop.f32.mrb[0].mxu0
    %2050 = vdwg.mxu0
    %v2051 = vadd.f32 %v1977, %v2048
    %v2052 = vlaneseq
    %v2053 = vshrl.u32 %v2052, 7
    %v2054 = vsub.s32 0, %v2053
    %v2055 = vrot.slane %v54, %v2054
    %v2056 = vadd.f32 %v1757, %v2055
    %v2057 = vadd.f32 %v2051, %v2055
    %v2058 = vadd.f32 %v28, %v2056
    %v2059 = vadd.f32 %v31, %v2057
    %v2060 = vsel %vm65, %v2058, 0.0
    %2061 = vadd.xlane.f32.xlu0 %v2060
    %v2062 = vpop.xlane.xlu0 %2061
    %v2063 = vsel %vm65, %v2059, 0.0
    %2064 = vadd.xlane.f32.xlu0 %v2063
    %v2065 = vpop.xlane.xlu0 %2064
    %v2066 = vrcp.pop 32.0
    %v2067 = vmul.f32 %v2062, %v2066
    %v2068 = vmul.f32 %v2065, %v2066
    %v2069 = vsub.f32 %v2058, %v2067
    %v2070 = vsub.f32 %v2059, %v2068
    %v2071 = vmul.f32 %v2069, %v2069
    %v2072 = vmul.f32 %v2070, %v2070
    %v2073 = vsel %vm65, %v2071, 0.0
    %2074 = vadd.xlane.f32.xlu0 %v2073
    %v2075 = vpop.xlane.xlu0 %2074
    %v2076 = vsel %vm65, %v2072, 0.0
    %2077 = vadd.xlane.f32.xlu0 %v2076
    %v2078 = vpop.xlane.xlu0 %2077
    %v2079 = vmul.f32 %v2075, %v2066
    %v2080 = vmul.f32 %v2078, %v2066
    %v2081 = vadd.f32 %v2079, 1e-05
    %v2082 = vadd.f32 %v2080, 1e-05
    %v2083 = vrsqrt.pop %v2081
    %v2084 = vrsqrt.pop %v2082
    %v2085 = vmul.f32 %v2069, %v2083
    %v2086 = vmul.f32 %v2070, %v2084
    %v2087 = vlaneseq
    %v2088 = vshrl.u32 %v2087, 7
    %v2089 = vsub.s32 0, %v2088
    %v2090 = vrot.slane %v57, %v2089
    %v2091 = vmul.f32 %v2085, %v2090
    %v2092 = vmul.f32 %v2086, %v2090
    %v2093 = vlaneseq
    %v2094 = vshrl.u32 %v2093, 7
    %v2095 = vsub.s32 0, %v2094
    %v2096 = vrot.slane %v58, %v2095
    %v2097 = vadd.f32 %v2091, %v2096
    %v2098 = vadd.f32 %v2092, %v2096
    %v2099 = vlaneseq
    %v2100 = vshrl.u32 %v2099, 7
    %v2101 = vsub.s32 0, %v2100
    %v2102 = vrot.slane %v55, %v2101
    %v2104 = vsel %vm65, %v2097, 0
    %v2107 = vsel %vm65, %v2098, 0
    %2109 = vmatprep.subr.mxu0 0.0
    %2110 = vmatpush1.msra.mxu0 %v41
    %2111 = vmatprep.subr.mxu0 0.0
    %2112 = vmatpush1.msra.mxu0 %v42
    %2113 = vmatprep.subr.mxu0 0.0
    %2114 = vmatpush1.msra.mxu0 %v43
    %2115 = vmatprep.subr.mxu0 0.0
    %2116 = vmatpush1.msra.mxu0 %v44
    %2117 = vmatprep.subr.mxu0 0.0
    %2118 = vmatpush1.msra.mxu0 0.0
    %2119 = vmatprep.subr.mxu0 0.0
    %2120 = vmatpush1.msra.mxu0 0.0
    %2121 = vmatprep.subr.mxu0 0.0
    %2122 = vmatpush1.msra.mxu0 0.0
    %2123 = vmatprep.subr.mxu0 0.0
    %2124 = vmatpush1.msra.mxu0 0.0
    %2125 = vmatprep.subr.mxu0 0.0
    %2126 = vmatpush1.msra.mxu0 0.0
    %2127 = vmatprep.subr.mxu0 0.0
    %2128 = vmatpush1.msra.mxu0 0.0
    %2129 = vmatprep.subr.mxu0 0.0
    %2130 = vmatpush1.msra.mxu0 0.0
    %2131 = vmatprep.subr.mxu0 0.0
    %2132 = vmatpush1.msra.mxu0 0.0
    %2133 = vmatprep.subr.mxu0 0.0
    %2134 = vmatpush1.msra.mxu0 0.0
    %2135 = vmatprep.subr.mxu0 0.0
    %2136 = vmatpush1.msra.mxu0 0.0
    %2137 = vmatprep.subr.mxu0 0.0
    %2138 = vmatpush1.msra.mxu0 0.0
    %2139 = vmatprep.subr.mxu0 0.0
    %2140 = vmatpush1.msra.mxu0 0.0
    %2141 = vmatprep.subr.mxu0 0.0
    %2142 = vmatpush1.msra.mxu0 0.0
    %2143 = vmatprep.subr.mxu0 0.0
    %2144 = vmatpush1.msra.mxu0 0.0
    %2145 = vmatprep.subr.mxu0 0.0
    %2146 = vmatpush1.msra.mxu0 0.0
    %2147 = vmatprep.subr.mxu0 0.0
    %2148 = vmatpush1.msra.mxu0 0.0
    %2149 = vmatprep.subr.mxu0 0.0
    %2150 = vmatpush1.msra.mxu0 0.0
    %2151 = vmatprep.subr.mxu0 0.0
    %2152 = vmatpush1.msra.mxu0 0.0
    %2153 = vmatprep.subr.mxu0 0.0
    %2154 = vmatpush1.msra.mxu0 0.0
    %2155 = vmatprep.subr.mxu0 0.0
    %2156 = vmatpush1.msra.mxu0 0.0
    %2157 = vmatprep.subr.mxu0 0.0
    %2158 = vmatpush1.msra.mxu0 0.0
    %2159 = vmatprep.subr.mxu0 0.0
    %2160 = vmatpush1.msra.mxu0 0.0
    %2161 = vmatprep.subr.mxu0 0.0
    %2162 = vmatpush1.msra.mxu0 0.0
    %2163 = vmatprep.subr.mxu0 0.0
    %2164 = vmatpush1.msra.mxu0 0.0
    %2165 = vmatprep.subr.mxu0 0.0
    %2166 = vmatpush1.msra.mxu0 0.0
    %2167 = vmatprep.subr.mxu0 0.0
    %2168 = vmatpush1.msra.mxu0 0.0
    %2169 = vmatprep.subr.mxu0 0.0
    %2170 = vmatpush1.msra.mxu0 0.0
    %2171 = vmatprep.subr.mxu0 0.0
    %2172 = vmatpush1.msra.mxu0 0.0
    %2173 = vmatprep.mubr.f32.mxu0 0.0
    %2174 = vmatmul.mubr.f32.gmra.mrb[0].mxu0 %v2104
    %v2175 = vpop.f32.mrb[0].mxu0
    %v2176 = vadd.f32 %v2102, %v2175
    %v2177 = vpop.f32.mrb[0].mxu0
    %2178 = vmatprep.mubr.f32.mxu0 0.0
    %2179 = vmatmul.mubr.f32.gmra.mrb[0].mxu0 %v2107
    %v2180 = vpop.f32.mrb[0].mxu0
    %v2181 = vadd.f32 %v2102, %v2180
    %v2182 = vpop.f32.mrb[0].mxu0
    %2183 = vdwg.mxu0
    %v2184 = vmax.f32 %v2176, 0.0
    %v2185 = vmax.f32 %v2181, 0.0
    %v2186 = vlaneseq
    %v2187 = vshrl.u32 %v2186, 7
    %v2188 = vsub.s32 0, %v2187
    %v2189 = vrot.slane %v56, %v2188
    %vm2190 = vcmask 523264
    %v2192 = vsel %vm2190, %v2184, 0
    %v2195 = vsel %vm2190, %v2185, 0
    %2197 = vmatprep.subr.mxu0 0.0
    %2198 = vmatpush1.msra.mxu0 %v45
    %2199 = vmatprep.subr.mxu0 0.0
    %2200 = vmatpush1.msra.mxu0 %v46
    %2201 = vmatprep.subr.mxu0 0.0
    %2202 = vmatpush1.msra.mxu0 %v47
    %2203 = vmatprep.subr.mxu0 0.0
    %2204 = vmatpush1.msra.mxu0 %v48
    %2205 = vmatprep.subr.mxu0 0.0
    %2206 = vmatpush1.msra.mxu0 %v49
    %2207 = vmatprep.subr.mxu0 0.0
    %2208 = vmatpush1.msra.mxu0 %v50
    %2209 = vmatprep.subr.mxu0 0.0
    %2210 = vmatpush1.msra.mxu0 %v51
    %2211 = vmatprep.subr.mxu0 0.0
    %2212 = vmatpush1.msra.mxu0 %v52
    %2213 = vmatprep.subr.mxu0 0.0
    %2214 = vmatpush1.msra.mxu0 0.0
    %2215 = vmatprep.subr.mxu0 0.0
    %2216 = vmatpush1.msra.mxu0 0.0
    %2217 = vmatprep.subr.mxu0 0.0
    %2218 = vmatpush1.msra.mxu0 0.0
    %2219 = vmatprep.subr.mxu0 0.0
    %2220 = vmatpush1.msra.mxu0 0.0
    %2221 = vmatprep.subr.mxu0 0.0
    %2222 = vmatpush1.msra.mxu0 0.0
    %2223 = vmatprep.subr.mxu0 0.0
    %2224 = vmatpush1.msra.mxu0 0.0
    %2225 = vmatprep.subr.mxu0 0.0
    %2226 = vmatpush1.msra.mxu0 0.0
    %2227 = vmatprep.subr.mxu0 0.0
    %2228 = vmatpush1.msra.mxu0 0.0
    %2229 = vmatprep.subr.mxu0 0.0
    %2230 = vmatpush1.msra.mxu0 0.0
    %2231 = vmatprep.subr.mxu0 0.0
    %2232 = vmatpush1.msra.mxu0 0.0
    %2233 = vmatprep.subr.mxu0 0.0
    %2234 = vmatpush1.msra.mxu0 0.0
    %2235 = vmatprep.subr.mxu0 0.0
    %2236 = vmatpush1.msra.mxu0 0.0
    %2237 = vmatprep.subr.mxu0 0.0
    %2238 = vmatpush1.msra.mxu0 0.0
    %2239 = vmatprep.subr.mxu0 0.0
    %2240 = vmatpush1.msra.mxu0 0.0
    %2241 = vmatprep.subr.mxu0 0.0
    %2242 = vmatpush1.msra.mxu0 0.0
    %2243 = vmatprep.subr.mxu0 0.0
    %2244 = vmatpush1.msra.mxu0 0.0
    %2245 = vmatprep.subr.mxu0 0.0
    %2246 = vmatpush1.msra.mxu0 0.0
    %2247 = vmatprep.subr.mxu0 0.0
    %2248 = vmatpush1.msra.mxu0 0.0
    %2249 = vmatprep.subr.mxu0 0.0
    %2250 = vmatpush1.msra.mxu0 0.0
    %2251 = vmatprep.subr.mxu0 0.0
    %2252 = vmatpush1.msra.mxu0 0.0
    %2253 = vmatprep.subr.mxu0 0.0
    %2254 = vmatpush1.msra.mxu0 0.0
    %2255 = vmatprep.subr.mxu0 0.0
    %2256 = vmatpush1.msra.mxu0 0.0
    %2257 = vmatprep.subr.mxu0 0.0
    %2258 = vmatpush1.msra.mxu0 0.0
    %2259 = vmatprep.subr.mxu0 0.0
    %2260 = vmatpush1.msra.mxu0 0.0
    %2261 = vmatprep.mubr.f32.mxu0 0.0
    %2262 = vmatmul.mubr.f32.gmra.mrb[0].mxu0 %v2192
    %v2263 = vpop.f32.mrb[0].mxu0
    %v2264 = vadd.f32 %v2189, %v2263
    %v2265 = vpop.f32.mrb[0].mxu0
    %2266 = vmatprep.mubr.f32.mxu0 0.0
    %2267 = vmatmul.mubr.f32.gmra.mrb[0].mxu0 %v2195
    %v2268 = vpop.f32.mrb[0].mxu0
    %v2269 = vadd.f32 %v2189, %v2268
    %v2270 = vpop.f32.mrb[0].mxu0
    %2271 = vdwg.mxu0
    %v2272 = vadd.f32 %v2097, %v2264
    %v2273 = vadd.f32 %v2098, %v2269
    %v2274 = vsel %vm65, %v2272, 0.0
    %2275 = vadd.xlane.f32.xlu0 %v2274
    %v2276 = vpop.xlane.xlu0 %2275
    %v2277 = vsel %vm65, %v2273, 0.0
    %2278 = vadd.xlane.f32.xlu0 %v2277
    %v2279 = vpop.xlane.xlu0 %2278
    %v2280 = vmul.f32 %v2276, %v2066
    %v2281 = vmul.f32 %v2279, %v2066
    %v2282 = vsub.f32 %v2272, %v2280
    %v2283 = vsub.f32 %v2273, %v2281
    %v2284 = vmul.f32 %v2282, %v2282
    %v2285 = vmul.f32 %v2283, %v2283
    %v2286 = vsel %vm65, %v2284, 0.0
    %2287 = vadd.xlane.f32.xlu0 %v2286
    %v2288 = vpop.xlane.xlu0 %2287
    %v2289 = vsel %vm65, %v2285, 0.0
    %2290 = vadd.xlane.f32.xlu0 %v2289
    %v2291 = vpop.xlane.xlu0 %2290
    %v2292 = vmul.f32 %v2288, %v2066
    %v2293 = vmul.f32 %v2291, %v2066
    %v2294 = vadd.f32 %v2292, 1e-05
    %v2295 = vadd.f32 %v2293, 1e-05
    %v2296 = vrsqrt.pop %v2294
    %v2297 = vrsqrt.pop %v2295
    %v2298 = vmul.f32 %v2282, %v2296
    %v2299 = vmul.f32 %v2283, %v2297
    %v2300 = vlaneseq
    %v2301 = vshrl.u32 %v2300, 7
    %v2302 = vsub.s32 0, %v2301
    %v2303 = vrot.slane %v59, %v2302
    %v2304 = vmul.f32 %v2298, %v2303
    %v2305 = vmul.f32 %v2299, %v2303
    %v2306 = vlaneseq
    %v2307 = vshrl.u32 %v2306, 7
    %v2308 = vsub.s32 0, %v2307
    %v2309 = vrot.slane %v60, %v2308
    %v2310 = vadd.f32 %v2304, %v2309
    %v2311 = vadd.f32 %v2305, %v2309
    %2312 = vst.msk [vmem:[%s3] sm:$0xff] %vm65, %v2310
    %2314 = vrot.lane.b32.xlu0 %v2311, 32
    %v2315 = vpop.permute.xlu0 %2314
    %vm2317 = vcmask 523520
    %2318 = vst.msk [vmem:[%s3] sm:$0xff] %vm2317, %v2315
    // Predicated region
    $region18: #{transformer_encoder_layer.1} parent=1 // pred_check
      _
    $region19: #{transformer_encoder_layer.1} parent=1 // pred_check_branch
      %2320 = sbr.rel (0) target = $region21
    $region20: #{transformer_encoder_layer.1} parent=1 // pred_region
      _
    $region21: #{transformer_encoder_layer.1} parent=1 // pred_fallthru
      _
    // Predicated region
    $region22: #{transformer_encoder_layer.1} parent=1 // pred_check
      _
    $region23: #{transformer_encoder_layer.1} parent=1 // pred_check_branch
      %2322 = sbr.rel (0) target = $region25
    $region24: #{transformer_encoder_layer.1} parent=1 // pred_region
      _
    $region25: #{transformer_encoder_layer.1} parent=1 // pred_fallthru
      _
    %2323 = vsyncpa [#allocation3], 1

</llo_original>
